<compile_context>
chip_gen: v6e
topology: v6e:2x2x1
jax: 0.10.0
libtpu: 0.0.40
codegen_flags: <defaults>
</compile_context>

<pallas_src>
import functools

import jax
import jax.numpy as jnp
from jax.experimental import pallas as pl
from jax.experimental.pallas import tpu as pltpu

BN_EPS = 1e-5


def _round_up(x, m):
    return (x + m - 1) // m * m


def _ppnet_kernel(hidden_dims, gate_hid_pads, out_pad, use_bf16, *refs):
    """refs = (feat, gate_emb, gW1_feat_all, gW1_gate_all, gb1_all, bias_pack,
               [W'_i, gW2_i] * L, W_final, out_ref, g1_scratch)

    bias_pack rows: [b'_0, gb2_0, b'_1, gb2_1, ..., b_final] (lane padded).
    All weights already carry their matmul dtype (pre-cast in the wrapper).
    """
    L = len(hidden_dims)
    feat_ref, ge_ref, gw1f_ref, gw1g_ref, gb1_ref, bias_ref = refs[:6]
    per_layer = refs[6:6 + 2 * L]
    wf_ref = refs[6 + 2 * L]
    out_ref = refs[6 + 2 * L + 1]
    g1_ref = refs[6 + 2 * L + 2]

    mm_dtype = jnp.bfloat16 if use_bf16 else jnp.float32

    def mm(a, w_ref):
        # MXU matmul, f32 accumulate.  Weights are pre-cast; only the
        # activation may need a cast (no-op on matching dtype).
        return jnp.dot(a.astype(mm_dtype), w_ref[...],
                       preferred_element_type=jnp.float32)

    feat = feat_ref[...]
    ge = ge_ref[...]

    # GateNU first layers for ALL layers in one wide, lane-aligned matmul
    # (gate input concat([feature_emb, gate_emb]) == split-weight form; it is
    # loop-invariant).  Stage into VMEM scratch so it does not live in vregs
    # across the unrolled layer loop.
    g1_ref[...] = jnp.maximum(
        mm(feat, gw1f_ref) + mm(ge, gw1g_ref) + gb1_ref[...], 0.0)

    h = feat
    off = 0
    for i in range(L):
        d_out = hidden_dims[i]
        gp = gate_hid_pads[i]
        w_ref = per_layer[2 * i]          # Linear weight with BN folded in
        gw2_ref = per_layer[2 * i + 1]    # gate second Linear (K padded)
        b = bias_ref[2 * i:2 * i + 1, :d_out]
        gb2 = bias_ref[2 * i + 1:2 * i + 2, :d_out]

        # mlp_layers[i]: Linear (+folded BatchNorm) -> ReLU   (dropout=0/eval)
        z = jnp.maximum(mm(h, w_ref) + b, 0.0)

        # gate_layers[i]: (hoisted first Linear) -> second Linear -> sigmoid*2
        g1 = g1_ref[:, off:off + gp]      # 128-aligned static slice
        off += gp
        g = jax.nn.sigmoid(mm(g1, gw2_ref) + gb2) * 2.0

        h = z * g                          # all elementwise math in f32

    bf = bias_ref[2 * L:2 * L + 1, :out_pad]
    out_ref[...] = mm(h, wf_ref) + bf      # lane-dense (TB, out_pad) store


def ppnet_mlp_pallas(feature_emb, gate_emb, layer_params, final_params,
                     *, block_b=512, use_bf16=False):
    """Run PPNet_MLP forward (PyTorch .eval() semantics).

    feature_emb: [B, input_dim] f32
    gate_emb:    [B, gate_emb_dim] f32
    layer_params: list of per-hidden-layer dicts (see init_params)
    final_params: (W_final [H_last, out_dim], b_final [1, out_dim])
    """
    B, d_in0 = feature_emb.shape
    d_gate = gate_emb.shape[1]
    L = len(layer_params)
    W_final, b_final = final_params
    out_dim = W_final.shape[1]
    out_pad = _round_up(out_dim, 128)

    hidden_dims = tuple(p["W"].shape[1] for p in layer_params)
    gate_hids = tuple(p["gW1"].shape[1] for p in layer_params)
    gate_hid_pads = tuple(_round_up(g, 128) for g in gate_hids)
    sum_gate_pad = sum(gate_hid_pads)

    w_dtype = jnp.bfloat16 if use_bf16 else jnp.float32
    act_dtype = jnp.bfloat16 if use_bf16 else jnp.float32

    # ---- Fold BatchNorm (eval) into the Linear (pure pre-compute). ----
    folded_W, folded_b = [], []
    for p in layer_params:
        s = p["gamma"] * jax.lax.rsqrt(p["var"] + BN_EPS)      # [1, d_out]
        folded_W.append((p["W"] * s).astype(w_dtype))          # scale columns
        folded_b.append((p["b"] - p["mean"]) * s + p["beta"])  # stays f32

    # ---- Gate first layer: split weight rows (no activation concat), pad
    #      each layer's columns to a 128-lane tile, stack -> one wide matmul.
    #      gW2 gets matching zero rows so the padded g1 columns contribute 0.
    gw1f_cols, gw1g_cols, gb1_cols, gW2_padded = [], [], [], []
    for i, p in enumerate(layer_params):
        pad_c = gate_hid_pads[i] - gate_hids[i]
        gw1f_cols.append(jnp.pad(p["gW1"][:d_in0], ((0, 0), (0, pad_c))))
        gw1g_cols.append(jnp.pad(p["gW1"][d_in0:], ((0, 0), (0, pad_c))))
        gb1_cols.append(jnp.pad(p["gb1"], ((0, 0), (0, pad_c))))
        gW2_padded.append(jnp.pad(p["gW2"], ((0, pad_c), (0, 0))).astype(w_dtype))
    gW1_feat = jnp.concatenate(gw1f_cols, axis=1).astype(w_dtype)
    gW1_gate = jnp.concatenate(gw1g_cols, axis=1).astype(w_dtype)
    gb1_all = jnp.concatenate(gb1_cols, axis=1)                 # f32

    # ---- Lane-dense final Linear. ----
    Wf_pad = jnp.pad(W_final, ((0, 0), (0, out_pad - out_dim))).astype(w_dtype)
    bf_pad = jnp.pad(b_final, ((0, 0), (0, out_pad - out_dim)))

    # ---- Pack remaining [1, D] row vectors into one f32 array. ----
    d_pad = _round_up(max(max(hidden_dims), out_pad), 128)
    rows = []
    for i in range(L):
        rows.append(jnp.pad(folded_b[i], ((0, 0), (0, d_pad - hidden_dims[i]))))
        rows.append(jnp.pad(layer_params[i]["gb2"],
                            ((0, 0), (0, d_pad - hidden_dims[i]))))
    rows.append(jnp.pad(bf_pad, ((0, 0), (0, d_pad - out_pad))))
    bias_pack = jnp.concatenate(rows, axis=0)                   # [2L+1, d_pad]

    # ---- Activations: stream as matmul dtype, no ragged-batch padding. ----
    feat_in = feature_emb.astype(act_dtype)
    gate_in = gate_emb.astype(act_dtype)

    # ---- Batch tiling (no wrapper-side pad; Pallas masks the tail block). ----
    if B <= block_b:
        TB = B                              # full-dim block is always legal
    else:
        TB = max(8, (block_b // 8) * 8)
    # Give v7x's 2 TensorCores >=2 parallel grid steps when the tile is large.
    if pl.cdiv(B, TB) < 2 and TB >= 256 and TB % 16 == 0:
        TB //= 2
    grid = (pl.cdiv(B, TB),)

    params = [gW1_feat, gW1_gate, gb1_all, bias_pack]
    for i in range(L):
        params.append(folded_W[i])
        params.append(gW2_padded[i])
    params.append(Wf_pad)

    def batch_spec(d):
        return pl.BlockSpec((TB, d), lambda i: (i, 0))

    def resident_spec(a, single_buffer):
        # Full-array block, constant index -> stays VMEM-resident across steps.
        if single_buffer:
            return pl.BlockSpec(a.shape, lambda i: (0, 0),
                                pipeline_mode=pl.Buffered(1))
        return pl.BlockSpec(a.shape, lambda i: (0, 0))

    # ---- VMEM budget / cost estimate. ----
    act_bytes = jnp.dtype(act_dtype).itemsize
    resident_bytes = sum(int(a.size) * a.dtype.itemsize for a in params)
    stream_bytes = 2 * TB * (d_in0 + d_gate) * act_bytes + 2 * TB * out_pad * 4
    scratch_bytes = TB * sum_gate_pad * 4
    vmem_need = resident_bytes + stream_bytes + scratch_bytes
    vmem_limit = int(min(100 * 2**20, max(16 * 2**20, 2 * vmem_need)))

    dims_chain = [d_in0] + list(hidden_dims)
    flops = 0
    for i in range(L):
        flops += 2 * B * dims_chain[i] * dims_chain[i + 1]        # mlp Linear
        flops += 2 * B * (d_in0 + d_gate) * gate_hid_pads[i]      # gate Linear1
        flops += 2 * B * gate_hid_pads[i] * hidden_dims[i]        # gate Linear2
    flops += 2 * B * dims_chain[-1] * out_pad                     # final Linear
    transcendentals = B * sum(hidden_dims)                        # sigmoids
    bytes_accessed = (feat_in.size * act_bytes + gate_in.size * act_bytes
                      + B * out_pad * 4 + resident_bytes)

    def build(single_buffer):
        in_specs = [batch_spec(d_in0), batch_spec(d_gate)]
        in_specs += [resident_spec(a, single_buffer) for a in params]
        return pl.pallas_call(
            functools.partial(_ppnet_kernel, hidden_dims, gate_hid_pads,
                              out_pad, use_bf16),
            out_shape=jax.ShapeDtypeStruct((B, out_pad), jnp.float32),
            grid=grid,
            in_specs=in_specs,
            out_specs=batch_spec(out_pad),
            scratch_shapes=[pltpu.VMEM((TB, sum_gate_pad), jnp.float32)],
            compiler_params=pltpu.CompilerParams(
                dimension_semantics=("parallel",),
                vmem_limit_bytes=vmem_limit),
            cost_estimate=pl.CostEstimate(
                flops=int(flops),
                transcendentals=int(transcendentals),
                bytes_accessed=int(bytes_accessed)),
        )

    try:
        out = build(True)(feat_in, gate_in, *params)
    except Exception:
        # Fallback if this backend rejects single-buffered resident inputs.
        out = build(False)(feat_in, gate_in, *params)

    return out[:, :out_dim]


def ppnet_mlp_ref(feature_emb, gate_emb, layer_params, final_params):
    """Pure-JAX reference with PyTorch .eval() semantics."""
    gate_input = jnp.concatenate([feature_emb, gate_emb], axis=-1)
    h = feature_emb
    for p in layer_params:
        z = h @ p["W"] + p["b"]
        z = (z - p["mean"]) * jax.lax.rsqrt(p["var"] + BN_EPS) * p["gamma"] + p["beta"]
        z = jnp.maximum(z, 0.0)
        g1 = jnp.maximum(gate_input @ p["gW1"] + p["gb1"], 0.0)
        g = jax.nn.sigmoid(g1 @ p["gW2"] + p["gb2"]) * 2.0
        h = z * g
    Wf, bf = final_params
    return h @ Wf + bf


def init_params(key, input_dim, gate_input_dim, hidden_units, output_dim,
                gate_hidden_dim=None):
    """Deterministic synthetic parameter init (shapes follow PPNet_MLP.__init__)."""
    dims = [input_dim] + hidden_units
    layer_params = []
    for idx in range(len(dims) - 1):
        d_in, d_out = dims[idx], dims[idx + 1]
        g_hid = d_out if gate_hidden_dim is None else gate_hidden_dim
        key, *ks = jax.random.split(key, 11)
        layer_params.append(dict(
            W=jax.random.normal(ks[0], (d_in, d_out), jnp.float32) * 0.1,
            b=jax.random.normal(ks[1], (1, d_out), jnp.float32) * 0.1,
            gamma=1.0 + 0.1 * jax.random.normal(ks[2], (1, d_out), jnp.float32),
            beta=0.1 * jax.random.normal(ks[3], (1, d_out), jnp.float32),
            mean=0.1 * jax.random.normal(ks[4], (1, d_out), jnp.float32),
            var=jax.random.uniform(ks[5], (1, d_out), jnp.float32, 0.5, 1.5),
            gW1=jax.random.normal(ks[6], (gate_input_dim, g_hid), jnp.float32) * 0.1,
            gb1=jax.random.normal(ks[7], (1, g_hid), jnp.float32) * 0.1,
            gW2=jax.random.normal(ks[8], (g_hid, d_out), jnp.float32) * 0.1,
            gb2=jax.random.normal(ks[9], (1, d_out), jnp.float32) * 0.1,
        ))
    key, k1, k2 = jax.random.split(key, 3)
    final_params = (
        jax.random.normal(k1, (dims[-1], output_dim), jnp.float32) * 0.1,
        jax.random.normal(k2, (1, output_dim), jnp.float32) * 0.1,
    )
    return layer_params, final_params


if __name__ == "__main__":
    # Small shapes consistent with the module's forward:
    #   feature_emb [B, input_dim], gate_emb [B, gate_emb_dim]
    #   gate_input_dim = input_dim + gate_emb_dim
    B = 8
    input_dim = 32
    gate_emb_dim = 32
    gate_input_dim = input_dim + gate_emb_dim
    hidden_units = [32, 32]
    output_dim = 1

    key = jax.random.PRNGKey(0)
    key, kf, kg = jax.random.split(key, 3)
    feature_emb = jax.random.normal(kf, (B, input_dim), jnp.float32)
    gate_emb = jax.random.normal(kg, (B, gate_emb_dim), jnp.float32)

    layer_params, final_params = init_params(
        key, input_dim, gate_input_dim, hidden_units, output_dim)

    ref = ppnet_mlp_ref(feature_emb, gate_emb, layer_params, final_params)

    # f32 matmul path.
    out = ppnet_mlp_pallas(feature_emb, gate_emb, layer_params, final_params,
                           use_bf16=False)
    out = jax.block_until_ready(out)
    assert out.shape == (B, output_dim)
    assert jnp.allclose(out, ref, atol=1e-5, rtol=1e-5), (out, ref)

    # bf16 transport/matmul path (f32 accumulate + f32 elementwise).
    out_bf16 = ppnet_mlp_pallas(feature_emb, gate_emb, layer_params,
                                final_params, use_bf16=True)
    out_bf16 = jax.block_until_ready(out_bf16)
    assert jnp.allclose(out_bf16, ref, atol=1e-1, rtol=1e-1), (out_bf16, ref)

    # TODO(synk): train-mode Dropout and batch-statistics BatchNorm are not
    # implemented; kernel reproduces PyTorch .eval() inference semantics.
    print("KERNEL_OK")
</pallas_src>

<mosaic_0001>
module attributes {stable_mosaic.version = 11 : i64} {
  func.func @_ppnet_kernel(%arg0: i32, %arg1: memref<8x32xf32, #tpu.memory_space<vmem>>, %arg2: memref<8x32xf32, #tpu.memory_space<vmem>>, %arg3: memref<32x256xf32, #tpu.memory_space<vmem>>, %arg4: memref<32x256xf32, #tpu.memory_space<vmem>>, %arg5: memref<1x256xf32, #tpu.memory_space<vmem>>, %arg6: memref<5x128xf32, #tpu.memory_space<vmem>>, %arg7: memref<32x32xf32, #tpu.memory_space<vmem>>, %arg8: memref<128x32xf32, #tpu.memory_space<vmem>>, %arg9: memref<32x32xf32, #tpu.memory_space<vmem>>, %arg10: memref<128x32xf32, #tpu.memory_space<vmem>>, %arg11: memref<32x128xf32, #tpu.memory_space<vmem>>, %arg12: memref<8x128xf32, #tpu.memory_space<vmem>>, %arg13: memref<8x256xf32, #tpu.memory_space<vmem>>) attributes {dimension_semantics = [#tpu.dimension_semantics<parallel>], iteration_bounds = array<i64: 1>, scalar_prefetch = 0 : i64, scratch_operands = 1 : i64, tpu.core_type = #tpu.core_type<tc>, window_params = [{transform_indices = @transform_0, window_bounds = array<i64: 8, 32>}, {transform_indices = @transform_1, window_bounds = array<i64: 8, 32>}, {pipeline_mode = #tpu.pipeline_mode<synchronous>, transform_indices = @transform_2, window_bounds = array<i64: 32, 256>}, {pipeline_mode = #tpu.pipeline_mode<synchronous>, transform_indices = @transform_3, window_bounds = array<i64: 32, 256>}, {pipeline_mode = #tpu.pipeline_mode<synchronous>, transform_indices = @transform_4, window_bounds = array<i64: 1, 256>}, {pipeline_mode = #tpu.pipeline_mode<synchronous>, transform_indices = @transform_5, window_bounds = array<i64: 5, 128>}, {pipeline_mode = #tpu.pipeline_mode<synchronous>, transform_indices = @transform_6, window_bounds = array<i64: 32, 32>}, {pipeline_mode = #tpu.pipeline_mode<synchronous>, transform_indices = @transform_7, window_bounds = array<i64: 128, 32>}, {pipeline_mode = #tpu.pipeline_mode<synchronous>, transform_indices = @transform_8, window_bounds = array<i64: 32, 32>}, {pipeline_mode = #tpu.pipeline_mode<synchronous>, transform_indices = @transform_9, window_bounds = array<i64: 128, 32>}, {pipeline_mode = #tpu.pipeline_mode<synchronous>, transform_indices = @transform_10, window_bounds = array<i64: 32, 128>}, {transform_indices = @transform_11, window_bounds = array<i64: 8, 128>}]} {
    %c0 = arith.constant 0 : index
    %c0_0 = arith.constant 0 : index
    %0 = vector.load %arg1[%c0, %c0_0] : memref<8x32xf32, #tpu.memory_space<vmem>>, vector<8x32xf32>
    %c0_1 = arith.constant 0 : index
    %c0_2 = arith.constant 0 : index
    %1 = vector.load %arg2[%c0_1, %c0_2] : memref<8x32xf32, #tpu.memory_space<vmem>>, vector<8x32xf32>
    %c0_3 = arith.constant 0 : index
    %c0_4 = arith.constant 0 : index
    %2 = vector.load %arg3[%c0_3, %c0_4] : memref<32x256xf32, #tpu.memory_space<vmem>>, vector<32x256xf32>
    %cst = arith.constant dense<0.000000e+00> : vector<8x256xf32>
    %3 = tpu.matmul %0, %2, %cst {dimension_numbers = #tpu.dot_dimension_numbers<[1], [0], [0], [1], [0, 0, 1, 1], [], []>} : vector<8x32xf32>, vector<32x256xf32>, vector<8x256xf32> -> vector<8x256xf32>
    %c0_5 = arith.constant 0 : index
    %c0_6 = arith.constant 0 : index
    %4 = vector.load %arg4[%c0_5, %c0_6] : memref<32x256xf32, #tpu.memory_space<vmem>>, vector<32x256xf32>
    %cst_7 = arith.constant dense<0.000000e+00> : vector<8x256xf32>
    %5 = tpu.matmul %1, %4, %cst_7 {dimension_numbers = #tpu.dot_dimension_numbers<[1], [0], [0], [1], [0, 0, 1, 1], [], []>} : vector<8x32xf32>, vector<32x256xf32>, vector<8x256xf32> -> vector<8x256xf32>
    %6 = arith.addf %3, %5 : vector<8x256xf32>
    %c0_8 = arith.constant 0 : index
    %c0_9 = arith.constant 0 : index
    %7 = vector.load %arg5[%c0_8, %c0_9] : memref<1x256xf32, #tpu.memory_space<vmem>>, vector<1x256xf32>
    %8 = vector.broadcast %7 : vector<1x256xf32> to vector<8x256xf32>
    %9 = arith.addf %6, %8 : vector<8x256xf32>
    %cst_10 = arith.constant 0.000000e+00 : f32
    %10 = vector.broadcast %cst_10 : f32 to vector<8x256xf32>
    %11 = arith.maximumf %9, %10 : vector<8x256xf32>
    %c0_11 = arith.constant 0 : index
    %c0_12 = arith.constant 0 : index
    %12 = vector.load %arg13[%c0_11, %c0_12] : memref<8x256xf32, #tpu.memory_space<vmem>>, vector<8x256xf32>
    tpu.vector_store %arg13[%c0_11, %c0_12], %11 {strides = array<i32>} : memref<8x256xf32, #tpu.memory_space<vmem>>, vector<8x256xf32>,
    %c0_13 = arith.constant 0 : index
    %c0_14 = arith.constant 0 : index
    %13 = vector.load %arg6[%c0_13, %c0_14] : memref<5x128xf32, #tpu.memory_space<vmem>>, vector<1x32xf32>
    %c1 = arith.constant 1 : index
    %c0_15 = arith.constant 0 : index
    %14 = vector.load %arg6[%c1, %c0_15] : memref<5x128xf32, #tpu.memory_space<vmem>>, vector<1x32xf32>
    %c0_16 = arith.constant 0 : index
    %c0_17 = arith.constant 0 : index
    %15 = vector.load %arg7[%c0_16, %c0_17] : memref<32x32xf32, #tpu.memory_space<vmem>>, vector<32x32xf32>
    %cst_18 = arith.constant dense<0.000000e+00> : vector<8x32xf32>
    %16 = tpu.matmul %0, %15, %cst_18 {dimension_numbers = #tpu.dot_dimension_numbers<[1], [0], [0], [1], [0, 0, 1, 1], [], []>} : vector<8x32xf32>, vector<32x32xf32>, vector<8x32xf32> -> vector<8x32xf32>
    %17 = vector.broadcast %13 : vector<1x32xf32> to vector<8x32xf32>
    %18 = arith.addf %16, %17 : vector<8x32xf32>
    %cst_19 = arith.constant 0.000000e+00 : f32
    %19 = vector.broadcast %cst_19 : f32 to vector<8x32xf32>
    %20 = arith.maximumf %18, %19 : vector<8x32xf32>
    %c0_20 = arith.constant 0 : index
    %c0_21 = arith.constant 0 : index
    %21 = vector.load %arg13[%c0_20, %c0_21] : memref<8x256xf32, #tpu.memory_space<vmem>>, vector<8x128xf32>
    %c0_22 = arith.constant 0 : index
    %c0_23 = arith.constant 0 : index
    %22 = vector.load %arg8[%c0_22, %c0_23] : memref<128x32xf32, #tpu.memory_space<vmem>>, vector<128x32xf32>
    %cst_24 = arith.constant dense<0.000000e+00> : vector<8x32xf32>
    %23 = tpu.matmul %21, %22, %cst_24 {dimension_numbers = #tpu.dot_dimension_numbers<[1], [0], [0], [1], [0, 0, 1, 1], [], []>} : vector<8x128xf32>, vector<128x32xf32>, vector<8x32xf32> -> vector<8x32xf32>
    %24 = vector.broadcast %14 : vector<1x32xf32> to vector<8x32xf32>
    %25 = arith.addf %23, %24 : vector<8x32xf32>
    %26 = arith.negf %25 : vector<8x32xf32>
    %27 = math.exp %26 : vector<8x32xf32>
    %cst_25 = arith.constant 1.000000e+00 : f32
    %28 = vector.broadcast %cst_25 : f32 to vector<8x32xf32>
    %29 = arith.addf %28, %27 : vector<8x32xf32>
    %30 = arith.divf %28, %29 : vector<8x32xf32>
    %cst_26 = arith.constant 2.000000e+00 : f32
    %31 = vector.broadcast %cst_26 : f32 to vector<8x32xf32>
    %32 = arith.mulf %30, %31 : vector<8x32xf32>
    %33 = arith.mulf %20, %32 : vector<8x32xf32>
    %c2 = arith.constant 2 : index
    %c0_27 = arith.constant 0 : index
    %34 = vector.load %arg6[%c2, %c0_27] : memref<5x128xf32, #tpu.memory_space<vmem>>, vector<1x32xf32>
    %c3 = arith.constant 3 : index
    %c0_28 = arith.constant 0 : index
    %35 = vector.load %arg6[%c3, %c0_28] : memref<5x128xf32, #tpu.memory_space<vmem>>, vector<1x32xf32>
    %c0_29 = arith.constant 0 : index
    %c0_30 = arith.constant 0 : index
    %36 = vector.load %arg9[%c0_29, %c0_30] : memref<32x32xf32, #tpu.memory_space<vmem>>, vector<32x32xf32>
    %cst_31 = arith.constant dense<0.000000e+00> : vector<8x32xf32>
    %37 = tpu.matmul %33, %36, %cst_31 {dimension_numbers = #tpu.dot_dimension_numbers<[1], [0], [0], [1], [0, 0, 1, 1], [], []>} : vector<8x32xf32>, vector<32x32xf32>, vector<8x32xf32> -> vector<8x32xf32>
    %38 = vector.broadcast %34 : vector<1x32xf32> to vector<8x32xf32>
    %39 = arith.addf %37, %38 : vector<8x32xf32>
    %cst_32 = arith.constant 0.000000e+00 : f32
    %40 = vector.broadcast %cst_32 : f32 to vector<8x32xf32>
    %41 = arith.maximumf %39, %40 : vector<8x32xf32>
    %c0_33 = arith.constant 0 : index
    %c128 = arith.constant 128 : index
    %42 = vector.load %arg13[%c0_33, %c128] : memref<8x256xf32, #tpu.memory_space<vmem>>, vector<8x128xf32>
    %c0_34 = arith.constant 0 : index
    %c0_35 = arith.constant 0 : index
    %43 = vector.load %arg10[%c0_34, %c0_35] : memref<128x32xf32, #tpu.memory_space<vmem>>, vector<128x32xf32>
    %cst_36 = arith.constant dense<0.000000e+00> : vector<8x32xf32>
    %44 = tpu.matmul %42, %43, %cst_36 {dimension_numbers = #tpu.dot_dimension_numbers<[1], [0], [0], [1], [0, 0, 1, 1], [], []>} : vector<8x128xf32>, vector<128x32xf32>, vector<8x32xf32> -> vector<8x32xf32>
    %45 = vector.broadcast %35 : vector<1x32xf32> to vector<8x32xf32>
    %46 = arith.addf %44, %45 : vector<8x32xf32>
    %47 = arith.negf %46 : vector<8x32xf32>
    %48 = math.exp %47 : vector<8x32xf32>
    %cst_37 = arith.constant 1.000000e+00 : f32
    %49 = vector.broadcast %cst_37 : f32 to vector<8x32xf32>
    %50 = arith.addf %49, %48 : vector<8x32xf32>
    %51 = arith.divf %49, %50 : vector<8x32xf32>
    %cst_38 = arith.constant 2.000000e+00 : f32
    %52 = vector.broadcast %cst_38 : f32 to vector<8x32xf32>
    %53 = arith.mulf %51, %52 : vector<8x32xf32>
    %54 = arith.mulf %41, %53 : vector<8x32xf32>
    %c4 = arith.constant 4 : index
    %c0_39 = arith.constant 0 : index
    %55 = vector.load %arg6[%c4, %c0_39] : memref<5x128xf32, #tpu.memory_space<vmem>>, vector<1x128xf32>
    %c0_40 = arith.constant 0 : index
    %c0_41 = arith.constant 0 : index
    %56 = vector.load %arg11[%c0_40, %c0_41] : memref<32x128xf32, #tpu.memory_space<vmem>>, vector<32x128xf32>
    %cst_42 = arith.constant dense<0.000000e+00> : vector<8x128xf32>
    %57 = tpu.matmul %54, %56, %cst_42 {dimension_numbers = #tpu.dot_dimension_numbers<[1], [0], [0], [1], [0, 0, 1, 1], [], []>} : vector<8x32xf32>, vector<32x128xf32>, vector<8x128xf32> -> vector<8x128xf32>
    %58 = vector.broadcast %55 : vector<1x128xf32> to vector<8x128xf32>
    %59 = arith.addf %57, %58 : vector<8x128xf32>
    %c0_43 = arith.constant 0 : index
    %c0_44 = arith.constant 0 : index
    %60 = vector.load %arg12[%c0_43, %c0_44] : memref<8x128xf32, #tpu.memory_space<vmem>>, vector<8x128xf32>
    tpu.vector_store %arg12[%c0_43, %c0_44], %59 {strides = array<i32>} : memref<8x128xf32, #tpu.memory_space<vmem>>, vector<8x128xf32>,
    return
  }
  func.func @transform_0(%arg0: i32) -> (i32, i32) {
    %c0_i32 = arith.constant 0 : i32
    %c0_i32_0 = arith.constant 0 : i32
    return %arg0, %c0_i32 : i32, i32
  }
  func.func @transform_1(%arg0: i32) -> (i32, i32) {
    %c0_i32 = arith.constant 0 : i32
    %c0_i32_0 = arith.constant 0 : i32
    return %arg0, %c0_i32 : i32, i32
  }
  func.func @transform_2(%arg0: i32) -> (i32, i32) {
    %c0_i32 = arith.constant 0 : i32
    %c0_i32_0 = arith.constant 0 : i32
    %c0_i32_1 = arith.constant 0 : i32
    return %c0_i32, %c0_i32_0 : i32, i32
  }
  func.func @transform_3(%arg0: i32) -> (i32, i32) {
    %c0_i32 = arith.constant 0 : i32
    %c0_i32_0 = arith.constant 0 : i32
    %c0_i32_1 = arith.constant 0 : i32
    return %c0_i32, %c0_i32_0 : i32, i32
  }
  func.func @transform_4(%arg0: i32) -> (i32, i32) {
    %c0_i32 = arith.constant 0 : i32
    %c0_i32_0 = arith.constant 0 : i32
    %c0_i32_1 = arith.constant 0 : i32
    return %c0_i32, %c0_i32_0 : i32, i32
  }
  func.func @transform_5(%arg0: i32) -> (i32, i32) {
    %c0_i32 = arith.constant 0 : i32
    %c0_i32_0 = arith.constant 0 : i32
    %c0_i32_1 = arith.constant 0 : i32
    return %c0_i32, %c0_i32_0 : i32, i32
  }
  func.func @transform_6(%arg0: i32) -> (i32, i32) {
    %c0_i32 = arith.constant 0 : i32
    %c0_i32_0 = arith.constant 0 : i32
    %c0_i32_1 = arith.constant 0 : i32
    return %c0_i32, %c0_i32_0 : i32, i32
  }
  func.func @transform_7(%arg0: i32) -> (i32, i32) {
    %c0_i32 = arith.constant 0 : i32
    %c0_i32_0 = arith.constant 0 : i32
    %c0_i32_1 = arith.constant 0 : i32
    return %c0_i32, %c0_i32_0 : i32, i32
  }
  func.func @transform_8(%arg0: i32) -> (i32, i32) {
    %c0_i32 = arith.constant 0 : i32
    %c0_i32_0 = arith.constant 0 : i32
    %c0_i32_1 = arith.constant 0 : i32
    return %c0_i32, %c0_i32_0 : i32, i32
  }
  func.func @transform_9(%arg0: i32) -> (i32, i32) {
    %c0_i32 = arith.constant 0 : i32
    %c0_i32_0 = arith.constant 0 : i32
    %c0_i32_1 = arith.constant 0 : i32
    return %c0_i32, %c0_i32_0 : i32, i32
  }
  func.func @transform_10(%arg0: i32) -> (i32, i32) {
    %c0_i32 = arith.constant 0 : i32
    %c0_i32_0 = arith.constant 0 : i32
    %c0_i32_1 = arith.constant 0 : i32
    return %c0_i32, %c0_i32_0 : i32, i32
  }
  func.func @transform_11(%arg0: i32) -> (i32, i32) {
    %c0_i32 = arith.constant 0 : i32
    %c0_i32_0 = arith.constant 0 : i32
    return %arg0, %c0_i32 : i32, i32
  }
}

module attributes {stable_mosaic.version = 11 : i64} {
  func.func @_ppnet_kernel(%arg0: i32, %arg1: memref<8x32xf32, #tpu.memory_space<vmem>>, %arg2: memref<8x32xf32, #tpu.memory_space<vmem>>, %arg3: memref<32x256xf32, #tpu.memory_space<vmem>>, %arg4: memref<32x256xf32, #tpu.memory_space<vmem>>, %arg5: memref<1x256xf32, #tpu.memory_space<vmem>>, %arg6: memref<5x128xf32, #tpu.memory_space<vmem>>, %arg7: memref<32x32xf32, #tpu.memory_space<vmem>>, %arg8: memref<128x32xf32, #tpu.memory_space<vmem>>, %arg9: memref<32x32xf32, #tpu.memory_space<vmem>>, %arg10: memref<128x32xf32, #tpu.memory_space<vmem>>, %arg11: memref<32x128xf32, #tpu.memory_space<vmem>>, %arg12: memref<8x128xf32, #tpu.memory_space<vmem>>, %arg13: memref<8x256xf32, #tpu.memory_space<vmem>>) attributes {dimension_semantics = [#tpu.dimension_semantics<parallel>], iteration_bounds = array<i64: 1>, scalar_prefetch = 0 : i64, scratch_operands = 1 : i64, tpu.core_type = #tpu.core_type<tc>, window_params = [{transform_indices = @transform_0, window_bounds = array<i64: 8, 32>}, {transform_indices = @transform_1, window_bounds = array<i64: 8, 32>}, {pipeline_mode = #tpu.pipeline_mode<synchronous>, transform_indices = @transform_2, window_bounds = array<i64: 32, 256>}, {pipeline_mode = #tpu.pipeline_mode<synchronous>, transform_indices = @transform_3, window_bounds = array<i64: 32, 256>}, {pipeline_mode = #tpu.pipeline_mode<synchronous>, transform_indices = @transform_4, window_bounds = array<i64: 1, 256>}, {pipeline_mode = #tpu.pipeline_mode<synchronous>, transform_indices = @transform_5, window_bounds = array<i64: 5, 128>}, {pipeline_mode = #tpu.pipeline_mode<synchronous>, transform_indices = @transform_6, window_bounds = array<i64: 32, 32>}, {pipeline_mode = #tpu.pipeline_mode<synchronous>, transform_indices = @transform_7, window_bounds = array<i64: 128, 32>}, {pipeline_mode = #tpu.pipeline_mode<synchronous>, transform_indices = @transform_8, window_bounds = array<i64: 32, 32>}, {pipeline_mode = #tpu.pipeline_mode<synchronous>, transform_indices = @transform_9, window_bounds = array<i64: 128, 32>}, {pipeline_mode = #tpu.pipeline_mode<synchronous>, transform_indices = @transform_10, window_bounds = array<i64: 32, 128>}, {transform_indices = @transform_11, window_bounds = array<i64: 8, 128>}]} {
    %c0 = arith.constant 0 : index
    %c0_0 = arith.constant 0 : index
    %0 = vector.load %arg1[%c0, %c0_0] : memref<8x32xf32, #tpu.memory_space<vmem>>, vector<8x32xf32>
    %c0_1 = arith.constant 0 : index
    %c0_2 = arith.constant 0 : index
    %1 = vector.load %arg2[%c0_1, %c0_2] : memref<8x32xf32, #tpu.memory_space<vmem>>, vector<8x32xf32>
    %c0_3 = arith.constant 0 : index
    %c0_4 = arith.constant 0 : index
    %2 = vector.load %arg3[%c0_3, %c0_4] : memref<32x256xf32, #tpu.memory_space<vmem>>, vector<32x256xf32>
    %cst = arith.constant dense<0.000000e+00> : vector<8x256xf32>
    %3 = tpu.matmul %0, %2, %cst {dimension_numbers = #tpu.dot_dimension_numbers<[1], [0], [0], [1], [0, 0, 1, 1], [], []>} : vector<8x32xf32>, vector<32x256xf32>, vector<8x256xf32> -> vector<8x256xf32>
    %c0_5 = arith.constant 0 : index
    %c0_6 = arith.constant 0 : index
    %4 = vector.load %arg4[%c0_5, %c0_6] : memref<32x256xf32, #tpu.memory_space<vmem>>, vector<32x256xf32>
    %cst_7 = arith.constant dense<0.000000e+00> : vector<8x256xf32>
    %5 = tpu.matmul %1, %4, %cst_7 {dimension_numbers = #tpu.dot_dimension_numbers<[1], [0], [0], [1], [0, 0, 1, 1], [], []>} : vector<8x32xf32>, vector<32x256xf32>, vector<8x256xf32> -> vector<8x256xf32>
    %6 = arith.addf %3, %5 : vector<8x256xf32>
    %c0_8 = arith.constant 0 : index
    %c0_9 = arith.constant 0 : index
    %7 = vector.load %arg5[%c0_8, %c0_9] : memref<1x256xf32, #tpu.memory_space<vmem>>, vector<1x256xf32>
    %8 = vector.broadcast %7 : vector<1x256xf32> to vector<8x256xf32>
    %9 = arith.addf %6, %8 : vector<8x256xf32>
    %cst_10 = arith.constant 0.000000e+00 : f32
    %10 = vector.broadcast %cst_10 : f32 to vector<8x256xf32>
    %11 = arith.maximumf %9, %10 : vector<8x256xf32>
    %c0_11 = arith.constant 0 : index
    %c0_12 = arith.constant 0 : index
    %12 = vector.load %arg13[%c0_11, %c0_12] : memref<8x256xf32, #tpu.memory_space<vmem>>, vector<8x256xf32>
    tpu.vector_store %arg13[%c0_11, %c0_12], %11 {strides = array<i32>} : memref<8x256xf32, #tpu.memory_space<vmem>>, vector<8x256xf32>,
    %c0_13 = arith.constant 0 : index
    %c0_14 = arith.constant 0 : index
    %13 = vector.load %arg6[%c0_13, %c0_14] : memref<5x128xf32, #tpu.memory_space<vmem>>, vector<1x32xf32>
    %c1 = arith.constant 1 : index
    %c0_15 = arith.constant 0 : index
    %14 = vector.load %arg6[%c1, %c0_15] : memref<5x128xf32, #tpu.memory_space<vmem>>, vector<1x32xf32>
    %c0_16 = arith.constant 0 : index
    %c0_17 = arith.constant 0 : index
    %15 = vector.load %arg7[%c0_16, %c0_17] : memref<32x32xf32, #tpu.memory_space<vmem>>, vector<32x32xf32>
    %cst_18 = arith.constant dense<0.000000e+00> : vector<8x32xf32>
    %16 = tpu.matmul %0, %15, %cst_18 {dimension_numbers = #tpu.dot_dimension_numbers<[1], [0], [0], [1], [0, 0, 1, 1], [], []>} : vector<8x32xf32>, vector<32x32xf32>, vector<8x32xf32> -> vector<8x32xf32>
    %17 = vector.broadcast %13 : vector<1x32xf32> to vector<8x32xf32>
    %18 = arith.addf %16, %17 : vector<8x32xf32>
    %cst_19 = arith.constant 0.000000e+00 : f32
    %19 = vector.broadcast %cst_19 : f32 to vector<8x32xf32>
    %20 = arith.maximumf %18, %19 : vector<8x32xf32>
    %c0_20 = arith.constant 0 : index
    %c0_21 = arith.constant 0 : index
    %21 = vector.load %arg13[%c0_20, %c0_21] : memref<8x256xf32, #tpu.memory_space<vmem>>, vector<8x128xf32>
    %c0_22 = arith.constant 0 : index
    %c0_23 = arith.constant 0 : index
    %22 = vector.load %arg8[%c0_22, %c0_23] : memref<128x32xf32, #tpu.memory_space<vmem>>, vector<128x32xf32>
    %cst_24 = arith.constant dense<0.000000e+00> : vector<8x32xf32>
    %23 = tpu.matmul %21, %22, %cst_24 {dimension_numbers = #tpu.dot_dimension_numbers<[1], [0], [0], [1], [0, 0, 1, 1], [], []>} : vector<8x128xf32>, vector<128x32xf32>, vector<8x32xf32> -> vector<8x32xf32>
    %24 = vector.broadcast %14 : vector<1x32xf32> to vector<8x32xf32>
    %25 = arith.addf %23, %24 : vector<8x32xf32>
    %26 = arith.negf %25 : vector<8x32xf32>
    %27 = math.exp %26 : vector<8x32xf32>
    %cst_25 = arith.constant 1.000000e+00 : f32
    %28 = vector.broadcast %cst_25 : f32 to vector<8x32xf32>
    %29 = arith.addf %28, %27 : vector<8x32xf32>
    %30 = arith.divf %28, %29 : vector<8x32xf32>
    %cst_26 = arith.constant 2.000000e+00 : f32
    %31 = vector.broadcast %cst_26 : f32 to vector<8x32xf32>
    %32 = arith.mulf %30, %31 : vector<8x32xf32>
    %33 = arith.mulf %20, %32 : vector<8x32xf32>
    %c2 = arith.constant 2 : index
    %c0_27 = arith.constant 0 : index
    %34 = vector.load %arg6[%c2, %c0_27] : memref<5x128xf32, #tpu.memory_space<vmem>>, vector<1x32xf32>
    %c3 = arith.constant 3 : index
    %c0_28 = arith.constant 0 : index
    %35 = vector.load %arg6[%c3, %c0_28] : memref<5x128xf32, #tpu.memory_space<vmem>>, vector<1x32xf32>
    %c0_29 = arith.constant 0 : index
    %c0_30 = arith.constant 0 : index
    %36 = vector.load %arg9[%c0_29, %c0_30] : memref<32x32xf32, #tpu.memory_space<vmem>>, vector<32x32xf32>
    %cst_31 = arith.constant dense<0.000000e+00> : vector<8x32xf32>
    %37 = tpu.matmul %33, %36, %cst_31 {dimension_numbers = #tpu.dot_dimension_numbers<[1], [0], [0], [1], [0, 0, 1, 1], [], []>} : vector<8x32xf32>, vector<32x32xf32>, vector<8x32xf32> -> vector<8x32xf32>
    %38 = vector.broadcast %34 : vector<1x32xf32> to vector<8x32xf32>
    %39 = arith.addf %37, %38 : vector<8x32xf32>
    %cst_32 = arith.constant 0.000000e+00 : f32
    %40 = vector.broadcast %cst_32 : f32 to vector<8x32xf32>
    %41 = arith.maximumf %39, %40 : vector<8x32xf32>
    %c0_33 = arith.constant 0 : index
    %c128 = arith.constant 128 : index
    %42 = vector.load %arg13[%c0_33, %c128] : memref<8x256xf32, #tpu.memory_space<vmem>>, vector<8x128xf32>
    %c0_34 = arith.constant 0 : index
    %c0_35 = arith.constant 0 : index
    %43 = vector.load %arg10[%c0_34, %c0_35] : memref<128x32xf32, #tpu.memory_space<vmem>>, vector<128x32xf32>
    %cst_36 = arith.constant dense<0.000000e+00> : vector<8x32xf32>
    %44 = tpu.matmul %42, %43, %cst_36 {dimension_numbers = #tpu.dot_dimension_numbers<[1], [0], [0], [1], [0, 0, 1, 1], [], []>} : vector<8x128xf32>, vector<128x32xf32>, vector<8x32xf32> -> vector<8x32xf32>
    %45 = vector.broadcast %35 : vector<1x32xf32> to vector<8x32xf32>
    %46 = arith.addf %44, %45 : vector<8x32xf32>
    %47 = arith.negf %46 : vector<8x32xf32>
    %48 = math.exp %47 : vector<8x32xf32>
    %cst_37 = arith.constant 1.000000e+00 : f32
    %49 = vector.broadcast %cst_37 : f32 to vector<8x32xf32>
    %50 = arith.addf %49, %48 : vector<8x32xf32>
    %51 = arith.divf %49, %50 : vector<8x32xf32>
    %cst_38 = arith.constant 2.000000e+00 : f32
    %52 = vector.broadcast %cst_38 : f32 to vector<8x32xf32>
    %53 = arith.mulf %51, %52 : vector<8x32xf32>
    %54 = arith.mulf %41, %53 : vector<8x32xf32>
    %c4 = arith.constant 4 : index
    %c0_39 = arith.constant 0 : index
    %55 = vector.load %arg6[%c4, %c0_39] : memref<5x128xf32, #tpu.memory_space<vmem>>, vector<1x128xf32>
    %c0_40 = arith.constant 0 : index
    %c0_41 = arith.constant 0 : index
    %56 = vector.load %arg11[%c0_40, %c0_41] : memref<32x128xf32, #tpu.memory_space<vmem>>, vector<32x128xf32>
    %cst_42 = arith.constant dense<0.000000e+00> : vector<8x128xf32>
    %57 = tpu.matmul %54, %56, %cst_42 {dimension_numbers = #tpu.dot_dimension_numbers<[1], [0], [0], [1], [0, 0, 1, 1], [], []>} : vector<8x32xf32>, vector<32x128xf32>, vector<8x128xf32> -> vector<8x128xf32>
    %58 = vector.broadcast %55 : vector<1x128xf32> to vector<8x128xf32>
    %59 = arith.addf %57, %58 : vector<8x128xf32>
    %c0_43 = arith.constant 0 : index
    %c0_44 = arith.constant 0 : index
    %60 = vector.load %arg12[%c0_43, %c0_44] : memref<8x128xf32, #tpu.memory_space<vmem>>, vector<8x128xf32>
    tpu.vector_store %arg12[%c0_43, %c0_44], %59 {strides = array<i32>} : memref<8x128xf32, #tpu.memory_space<vmem>>, vector<8x128xf32>,
    return
  }
  func.func @transform_0(%arg0: i32) -> (i32, i32) {
    %c0_i32 = arith.constant 0 : i32
    %c0_i32_0 = arith.constant 0 : i32
    return %arg0, %c0_i32 : i32, i32
  }
  func.func @transform_1(%arg0: i32) -> (i32, i32) {
    %c0_i32 = arith.constant 0 : i32
    %c0_i32_0 = arith.constant 0 : i32
    return %arg0, %c0_i32 : i32, i32
  }
  func.func @transform_2(%arg0: i32) -> (i32, i32) {
    %c0_i32 = arith.constant 0 : i32
    %c0_i32_0 = arith.constant 0 : i32
    %c0_i32_1 = arith.constant 0 : i32
    return %c0_i32, %c0_i32_0 : i32, i32
  }
  func.func @transform_3(%arg0: i32) -> (i32, i32) {
    %c0_i32 = arith.constant 0 : i32
    %c0_i32_0 = arith.constant 0 : i32
    %c0_i32_1 = arith.constant 0 : i32
    return %c0_i32, %c0_i32_0 : i32, i32
  }
  func.func @transform_4(%arg0: i32) -> (i32, i32) {
    %c0_i32 = arith.constant 0 : i32
    %c0_i32_0 = arith.constant 0 : i32
    %c0_i32_1 = arith.constant 0 : i32
    return %c0_i32, %c0_i32_0 : i32, i32
  }
  func.func @transform_5(%arg0: i32) -> (i32, i32) {
    %c0_i32 = arith.constant 0 : i32
    %c0_i32_0 = arith.constant 0 : i32
    %c0_i32_1 = arith.constant 0 : i32
    return %c0_i32, %c0_i32_0 : i32, i32
  }
  func.func @transform_6(%arg0: i32) -> (i32, i32) {
    %c0_i32 = arith.constant 0 : i32
    %c0_i32_0 = arith.constant 0 : i32
    %c0_i32_1 = arith.constant 0 : i32
    return %c0_i32, %c0_i32_0 : i32, i32
  }
  func.func @transform_7(%arg0: i32) -> (i32, i32) {
    %c0_i32 = arith.constant 0 : i32
    %c0_i32_0 = arith.constant 0 : i32
    %c0_i32_1 = arith.constant 0 : i32
    return %c0_i32, %c0_i32_0 : i32, i32
  }
  func.func @transform_8(%arg0: i32) -> (i32, i32) {
    %c0_i32 = arith.constant 0 : i32
    %c0_i32_0 = arith.constant 0 : i32
    %c0_i32_1 = arith.constant 0 : i32
    return %c0_i32, %c0_i32_0 : i32, i32
  }
  func.func @transform_9(%arg0: i32) -> (i32, i32) {
    %c0_i32 = arith.constant 0 : i32
    %c0_i32_0 = arith.constant 0 : i32
    %c0_i32_1 = arith.constant 0 : i32
    return %c0_i32, %c0_i32_0 : i32, i32
  }
  func.func @transform_10(%arg0: i32) -> (i32, i32) {
    %c0_i32 = arith.constant 0 : i32
    %c0_i32_0 = arith.constant 0 : i32
    %c0_i32_1 = arith.constant 0 : i32
    return %c0_i32, %c0_i32_0 : i32, i32
  }
  func.func @transform_11(%arg0: i32) -> (i32, i32) {
    %c0_i32 = arith.constant 0 : i32
    %c0_i32_0 = arith.constant 0 : i32
    return %arg0, %c0_i32 : i32, i32
  }
}

</mosaic_0001>

<llo_original>
// kernel: tpu_custom_call.1
$region0: #{tpu_custom_call.1}
  #allocation0 [shape = 'u32[]', space=smem, size = 0x4, offset = 0x4, fixed_abs, tag = 'smem constant byte address 0x4 - core index']
  #allocation1 [shape = 'u32[144,128]{1,0:T(1,128)}', space=vmem, size = 0x12000, scoped, tag = 'internal scratch']
  #allocation2 [shape = 'f32[8,256]{1,0:T(8,128)}', space=vmem, size = 0x2000, scoped, tag = 'scratch operand']
  %s0 = inlined_call_operand.vmem [shape: f32[8,32], index: 0, kind: input, shape index: {}]
  %s1 = inlined_call_operand.vmem [shape: f32[8,32], index: 1, kind: input, shape index: {}]
  %s2 = inlined_call_operand.vmem [shape: f32[32,256], index: 2, kind: input, shape index: {}]
  %s3 = inlined_call_operand.vmem [shape: f32[32,256], index: 3, kind: input, shape index: {}]
  %s4 = inlined_call_operand.vmem [shape: f32[1,256], index: 4, kind: input, shape index: {}]
  %s5 = inlined_call_operand.vmem [shape: f32[5,128], index: 5, kind: input, shape index: {}]
  %s6 = inlined_call_operand.vmem [shape: f32[32,32], index: 6, kind: input, shape index: {}]
  %s7 = inlined_call_operand.vmem [shape: f32[128,32], index: 7, kind: input, shape index: {}]
  %s8 = inlined_call_operand.vmem [shape: f32[32,32], index: 8, kind: input, shape index: {}]
  %s9 = inlined_call_operand.vmem [shape: f32[128,32], index: 9, kind: input, shape index: {}]
  %s10 = inlined_call_operand.vmem [shape: f32[32,128], index: 10, kind: input, shape index: {}]
  %s11 = inlined_call_operand.hbm [shape: f32[8,128], index: 11, kind: output, shape index: {}]
  %s12 = sld [smem:[#allocation0]]
  $region54: #{tpu_custom_call.1} parent=0
    _
  %s14 = ssub.s32 1, %s12
  %s15 = scalar_select 0, %s14, %s12
  $region1: #{tpu_custom_call.1} parent=0
    #allocation3 [shape = 'u8[4096]{0}', space=vmem, size = 0x1000, scoped, tag = 'output window, operand 0, single buffered']
    #allocation4 [shape = 's32[1]{0}', space=sflag, size = 0x4, scoped, tag = 'scoped memory for tpu_custom_call.1']
    %16 = vsyncpa [#allocation4], 0
    // Predicated region
    $region2: #{tpu_custom_call.1} parent=1 // pred_check
      _
    $region3: #{tpu_custom_call.1} parent=1 // pred_check_branch
      %18 = sbr.rel (0) target = $region5
    $region4: #{tpu_custom_call.1} parent=1 // pred_region
      _
    $region5: #{tpu_custom_call.1} parent=1 // pred_fallthru
      _
    // Predicated region
    $region6: #{tpu_custom_call.1} parent=1 // pred_check
      _
    $region7: #{tpu_custom_call.1} parent=1 // pred_check_branch
      %20 = sbr.rel (0) target = $region9
    $region8: #{tpu_custom_call.1} parent=1 // pred_region
      _
    $region9: #{tpu_custom_call.1} parent=1 // pred_fallthru
      _
    // Predicated region
    $region10: #{tpu_custom_call.1} parent=1 // pred_check
      _
    $region11: #{tpu_custom_call.1} parent=1 // pred_check_branch
      %22 = sbr.rel (0) target = $region13
    $region12: #{tpu_custom_call.1} parent=1 // pred_region
      _
    $region13: #{tpu_custom_call.1} parent=1 // pred_fallthru
      _
    // Predicated region
    $region14: #{tpu_custom_call.1} parent=1 // pred_check
      _
    $region15: #{tpu_custom_call.1} parent=1 // pred_check_branch
      %24 = sbr.rel (0) target = $region17
    $region16: #{tpu_custom_call.1} parent=1 // pred_region
      _
    $region17: #{tpu_custom_call.1} parent=1 // pred_fallthru
      _
    // Predicated region
    $region18: #{tpu_custom_call.1} parent=1 // pred_check
      _
    $region19: #{tpu_custom_call.1} parent=1 // pred_check_branch
      %26 = sbr.rel (0) target = $region21
    $region20: #{tpu_custom_call.1} parent=1 // pred_region
      _
    $region21: #{tpu_custom_call.1} parent=1 // pred_fallthru
      _
    // Predicated region
    $region22: #{tpu_custom_call.1} parent=1 // pred_check
      _
    $region23: #{tpu_custom_call.1} parent=1 // pred_check_branch
      %28 = sbr.rel (0) target = $region25
    $region24: #{tpu_custom_call.1} parent=1 // pred_region
      _
    $region25: #{tpu_custom_call.1} parent=1 // pred_fallthru
      _
    // Predicated region
    $region26: #{tpu_custom_call.1} parent=1 // pred_check
      _
    $region27: #{tpu_custom_call.1} parent=1 // pred_check_branch
      %30 = sbr.rel (0) target = $region29
    $region28: #{tpu_custom_call.1} parent=1 // pred_region
      _
    $region29: #{tpu_custom_call.1} parent=1 // pred_fallthru
      _
    // Predicated region
    $region30: #{tpu_custom_call.1} parent=1 // pred_check
      _
    $region31: #{tpu_custom_call.1} parent=1 // pred_check_branch
      %32 = sbr.rel (0) target = $region33
    $region32: #{tpu_custom_call.1} parent=1 // pred_region
      _
    $region33: #{tpu_custom_call.1} parent=1 // pred_fallthru
      _
    // Predicated region
    $region34: #{tpu_custom_call.1} parent=1 // pred_check
      _
    $region35: #{tpu_custom_call.1} parent=1 // pred_check_branch
      %34 = sbr.rel (0) target = $region37
    $region36: #{tpu_custom_call.1} parent=1 // pred_region
      _
    $region37: #{tpu_custom_call.1} parent=1 // pred_fallthru
      _
    // Predicated region
    $region38: #{tpu_custom_call.1} parent=1 // pred_check
      _
    $region39: #{tpu_custom_call.1} parent=1 // pred_check_branch
      %36 = sbr.rel (0) target = $region41
    $region40: #{tpu_custom_call.1} parent=1 // pred_region
      _
    $region41: #{tpu_custom_call.1} parent=1 // pred_fallthru
      _
    // Predicated region
    $region42: #{tpu_custom_call.1} parent=1 // pred_check
      _
    $region43: #{tpu_custom_call.1} parent=1 // pred_check_branch
      %38 = sbr.rel (0) target = $region45
    $region44: #{tpu_custom_call.1} parent=1 // pred_region
      _
    $region45: #{tpu_custom_call.1} parent=1 // pred_fallthru
      _
    %v39 = vld [vmem:[%s0] sm:$0xff]
    %v40 = vld [vmem:[%s1] sm:$0xff]
    %v41 = vld [vmem:[%s2] sm:$0xff]
    %v42 = vld [vmem:[%s2 + $0x8] sm:$0xff]
    %v43 = vld [vmem:[%s2 + $0x10] sm:$0xff]
    %v44 = vld [vmem:[%s2 + $0x18] sm:$0xff]
    %v45 = vld [vmem:[%s2 + $0x20] sm:$0xff]
    %v46 = vld [vmem:[%s2 + $0x28] sm:$0xff]
    %v47 = vld [vmem:[%s2 + $0x30] sm:$0xff]
    %v48 = vld [vmem:[%s2 + $0x38] sm:$0xff]
    %v49 = vld [vmem:[%s3] sm:$0xff]
    %v50 = vld [vmem:[%s3 + $0x8] sm:$0xff]
    %v51 = vld [vmem:[%s3 + $0x10] sm:$0xff]
    %v52 = vld [vmem:[%s3 + $0x18] sm:$0xff]
    %v53 = vld [vmem:[%s3 + $0x20] sm:$0xff]
    %v54 = vld [vmem:[%s3 + $0x28] sm:$0xff]
    %v55 = vld [vmem:[%s3 + $0x30] sm:$0xff]
    %v56 = vld [vmem:[%s3 + $0x38] sm:$0xff]
    %vm57 = vcmask 261120
    %v59 = vsel %vm57, %v40, 0
    %61 = vmatprep.subr.mxu0 0.0
    %62 = vmatpush1.msra.mxu0 0.0
    %63 = vmatprep.subr.mxu0 0.0
    %64 = vmatpush1.msra.mxu0 0.0
    %65 = vmatprep.subr.mxu0 0.0
    %66 = vmatpush1.msra.mxu0 0.0
    %67 = vmatprep.subr.mxu0 0.0
    %68 = vmatpush1.msra.mxu0 0.0
    %69 = vmatprep.subr.mxu0 0.0
    %70 = vmatpush1.msra.mxu0 0.0
    %71 = vmatprep.subr.mxu0 0.0
    %72 = vmatpush1.msra.mxu0 0.0
    %73 = vmatprep.subr.mxu0 0.0
    %74 = vmatpush1.msra.mxu0 0.0
    %75 = vmatprep.subr.mxu0 0.0
    %76 = vmatpush1.msra.mxu0 0.0
    %77 = vmatprep.subr.mxu0 0.0
    %78 = vmatpush1.msra.mxu0 0.0
    %79 = vmatprep.subr.mxu0 0.0
    %80 = vmatpush1.msra.mxu0 0.0
    %81 = vmatprep.subr.mxu0 0.0
    %82 = vmatpush1.msra.mxu0 0.0
    %83 = vmatprep.subr.mxu0 0.0
    %84 = vmatpush1.msra.mxu0 0.0
    %85 = vmatprep.subr.mxu0 %v56
    %86 = vmatpush1.msra.mxu0 %v55
    %87 = vmatprep.subr.mxu0 %v54
    %88 = vmatpush1.msra.mxu0 %v53
    %89 = vmatprep.subr.mxu0 %v52
    %90 = vmatpush1.msra.mxu0 %v51
    %91 = vmatprep.subr.mxu0 %v50
    %92 = vmatpush1.msra.mxu0 %v49
    %93 = vmatprep.subr.mxu0 0.0
    %94 = vmatpush2.msra.mxu0 0.0
    %95 = vmatprep.subr.mxu0 0.0
    %96 = vmatpush2.msra.mxu0 0.0
    %97 = vmatprep.subr.mxu0 0.0
    %98 = vmatpush2.msra.mxu0 0.0
    %99 = vmatprep.subr.mxu0 0.0
    %100 = vmatpush2.msra.mxu0 0.0
    %101 = vmatprep.subr.mxu0 0.0
    %102 = vmatpush2.msra.mxu0 0.0
    %103 = vmatprep.subr.mxu0 0.0
    %104 = vmatpush2.msra.mxu0 0.0
    %105 = vmatprep.subr.mxu0 0.0
    %106 = vmatpush2.msra.mxu0 0.0
    %107 = vmatprep.subr.mxu0 0.0
    %108 = vmatpush2.msra.mxu0 0.0
    %109 = vmatprep.subr.mxu0 0.0
    %110 = vmatpush2.msra.mxu0 0.0
    %111 = vmatprep.subr.mxu0 0.0
    %112 = vmatpush2.msra.mxu0 0.0
    %113 = vmatprep.subr.mxu0 0.0
    %114 = vmatpush2.msra.mxu0 0.0
    %115 = vmatprep.subr.mxu0 0.0
    %116 = vmatpush2.msra.mxu0 0.0
    %117 = vmatprep.subr.mxu0 0.0
    %118 = vmatpush2.msra.mxu0 0.0
    %119 = vmatprep.subr.mxu0 0.0
    %120 = vmatpush2.msra.mxu0 0.0
    %121 = vmatprep.subr.mxu0 0.0
    %122 = vmatpush2.msra.mxu0 0.0
    %123 = vmatprep.subr.mxu0 0.0
    %124 = vmatpush2.msra.mxu0 0.0
    %125 = vmatprep.mubr.f32.mxu0 0.0
    %126 = vmatmul.mubr.f32.gmra.mxu0 %v59
    %v127 = vpop.f32.mrf.mxu0
    %v128 = vadd.f32 0.0, %v127
    %v129 = vpop.f32.mrf.mxu0
    %v130 = vadd.f32 0.0, %v129
    %131 = vdwg.mxu0
    %v133 = vsel %vm57, %v39, 0
    %135 = vmatprep.subr.mxu0 0.0
    %136 = vmatpush1.msra.mxu0 0.0
    %137 = vmatprep.subr.mxu0 0.0
    %138 = vmatpush1.msra.mxu0 0.0
    %139 = vmatprep.subr.mxu0 0.0
    %140 = vmatpush1.msra.mxu0 0.0
    %141 = vmatprep.subr.mxu0 0.0
    %142 = vmatpush1.msra.mxu0 0.0
    %143 = vmatprep.subr.mxu0 0.0
    %144 = vmatpush1.msra.mxu0 0.0
    %145 = vmatprep.subr.mxu0 0.0
    %146 = vmatpush1.msra.mxu0 0.0
    %147 = vmatprep.subr.mxu0 0.0
    %148 = vmatpush1.msra.mxu0 0.0
    %149 = vmatprep.subr.mxu0 0.0
    %150 = vmatpush1.msra.mxu0 0.0
    %151 = vmatprep.subr.mxu0 0.0
    %152 = vmatpush1.msra.mxu0 0.0
    %153 = vmatprep.subr.mxu0 0.0
    %154 = vmatpush1.msra.mxu0 0.0
    %155 = vmatprep.subr.mxu0 0.0
    %156 = vmatpush1.msra.mxu0 0.0
    %157 = vmatprep.subr.mxu0 0.0
    %158 = vmatpush1.msra.mxu0 0.0
    %159 = vmatprep.subr.mxu0 %v48
    %160 = vmatpush1.msra.mxu0 %v47
    %161 = vmatprep.subr.mxu0 %v46
    %162 = vmatpush1.msra.mxu0 %v45
    %163 = vmatprep.subr.mxu0 %v44
    %164 = vmatpush1.msra.mxu0 %v43
    %165 = vmatprep.subr.mxu0 %v42
    %166 = vmatpush1.msra.mxu0 %v41
    %167 = vmatprep.subr.mxu0 0.0
    %168 = vmatpush2.msra.mxu0 0.0
    %169 = vmatprep.subr.mxu0 0.0
    %170 = vmatpush2.msra.mxu0 0.0
    %171 = vmatprep.subr.mxu0 0.0
    %172 = vmatpush2.msra.mxu0 0.0
    %173 = vmatprep.subr.mxu0 0.0
    %174 = vmatpush2.msra.mxu0 0.0
    %175 = vmatprep.subr.mxu0 0.0
    %176 = vmatpush2.msra.mxu0 0.0
    %177 = vmatprep.subr.mxu0 0.0
    %178 = vmatpush2.msra.mxu0 0.0
    %179 = vmatprep.subr.mxu0 0.0
    %180 = vmatpush2.msra.mxu0 0.0
    %181 = vmatprep.subr.mxu0 0.0
    %182 = vmatpush2.msra.mxu0 0.0
    %183 = vmatprep.subr.mxu0 0.0
    %184 = vmatpush2.msra.mxu0 0.0
    %185 = vmatprep.subr.mxu0 0.0
    %186 = vmatpush2.msra.mxu0 0.0
    %187 = vmatprep.subr.mxu0 0.0
    %188 = vmatpush2.msra.mxu0 0.0
    %189 = vmatprep.subr.mxu0 0.0
    %190 = vmatpush2.msra.mxu0 0.0
    %191 = vmatprep.subr.mxu0 0.0
    %192 = vmatpush2.msra.mxu0 0.0
    %193 = vmatprep.subr.mxu0 0.0
    %194 = vmatpush2.msra.mxu0 0.0
    %195 = vmatprep.subr.mxu0 0.0
    %196 = vmatpush2.msra.mxu0 0.0
    %197 = vmatprep.subr.mxu0 0.0
    %198 = vmatpush2.msra.mxu0 0.0
    %199 = vmatprep.mubr.f32.mxu0 0.0
    %200 = vmatmul.mubr.f32.gmra.mxu0 %v133
    %v201 = vpop.f32.mrf.mxu0
    %v202 = vadd.f32 %v128, %v201
    %v203 = vpop.f32.mrf.mxu0
    %v204 = vadd.f32 %v130, %v203
    %205 = vdwg.mxu0
    %v206 = vld [vmem:[%s4] sm:$0x3]
    %v208 = vlaneseq
    %v209 = vshrl.u32 %v208, 7
    %v210 = vsub.s32 0, %v209
    %v211 = vrot.slane %v206, %v210
    %v212 = vlaneseq
    %v213 = vshrl.u32 %v212, 7
    %v214 = vsub.s32 1, %v213
    %v215 = vrot.slane %v206, %v214
    %v218 = vadd.f32 %v202, %v211
    %v219 = vadd.f32 %v204, %v215
    %v220 = vmax.f32 %v218, 0.0
    %v221 = vmax.f32 %v219, 0.0
    %222 = vst [vmem:[#allocation2] sm:$0xff] %v220
    %223 = vst [vmem:[#allocation2 + $0x8] sm:$0xff] %v221
    %v224 = vld [vmem:[%s5] sm:$0x1]
    %v225 = vld [vmem:[%s5 + $0x1] sm:$0x1]
    %v226 = vld [vmem:[%s6] sm:$0xff]
    %v227 = vld [vmem:[%s6 + $0x8] sm:$0xff]
    %v228 = vld [vmem:[%s6 + $0x10] sm:$0xff]
    %v229 = vld [vmem:[%s6 + $0x18] sm:$0xff]
    %v230 = vlaneseq
    %v231 = vshrl.u32 %v230, 7
    %v232 = vsub.s32 0, %v231
    %v233 = vrot.slane %v224, %v232
    %234 = vmatprep.subr.mxu0 0.0
    %235 = vmatpush1.msra.mxu0 0.0
    %236 = vmatprep.subr.mxu0 0.0
    %237 = vmatpush1.msra.mxu0 0.0
    %238 = vmatprep.subr.mxu0 0.0
    %239 = vmatpush1.msra.mxu0 0.0
    %240 = vmatprep.subr.mxu0 0.0
    %241 = vmatpush1.msra.mxu0 0.0
    %242 = vmatprep.subr.mxu0 0.0
    %243 = vmatpush1.msra.mxu0 0.0
    %244 = vmatprep.subr.mxu0 0.0
    %245 = vmatpush1.msra.mxu0 0.0
    %246 = vmatprep.subr.mxu0 0.0
    %247 = vmatpush1.msra.mxu0 0.0
    %248 = vmatprep.subr.mxu0 0.0
    %249 = vmatpush1.msra.mxu0 0.0
    %250 = vmatprep.subr.mxu0 0.0
    %251 = vmatpush1.msra.mxu0 0.0
    %252 = vmatprep.subr.mxu0 0.0
    %253 = vmatpush1.msra.mxu0 0.0
    %254 = vmatprep.subr.mxu0 0.0
    %255 = vmatpush1.msra.mxu0 0.0
    %256 = vmatprep.subr.mxu0 0.0
    %257 = vmatpush1.msra.mxu0 0.0
    %258 = vmatprep.subr.mxu0 0.0
    %259 = vmatpush1.msra.mxu0 %v229
    %260 = vmatprep.subr.mxu0 0.0
    %261 = vmatpush1.msra.mxu0 %v228
    %262 = vmatprep.subr.mxu0 0.0
    %263 = vmatpush1.msra.mxu0 %v227
    %264 = vmatprep.subr.mxu0 0.0
    %265 = vmatpush1.msra.mxu0 %v226
    %266 = vmatprep.subr.mxu0 0.0
    %267 = vmatpush2.msra.mxu0 0.0
    %268 = vmatprep.subr.mxu0 0.0
    %269 = vmatpush2.msra.mxu0 0.0
    %270 = vmatprep.subr.mxu0 0.0
    %271 = vmatpush2.msra.mxu0 0.0
    %272 = vmatprep.subr.mxu0 0.0
    %273 = vmatpush2.msra.mxu0 0.0
    %274 = vmatprep.subr.mxu0 0.0
    %275 = vmatpush2.msra.mxu0 0.0
    %276 = vmatprep.subr.mxu0 0.0
    %277 = vmatpush2.msra.mxu0 0.0
    %278 = vmatprep.subr.mxu0 0.0
    %279 = vmatpush2.msra.mxu0 0.0
    %280 = vmatprep.subr.mxu0 0.0
    %281 = vmatpush2.msra.mxu0 0.0
    %282 = vmatprep.subr.mxu0 0.0
    %283 = vmatpush2.msra.mxu0 0.0
    %284 = vmatprep.subr.mxu0 0.0
    %285 = vmatpush2.msra.mxu0 0.0
    %286 = vmatprep.subr.mxu0 0.0
    %287 = vmatpush2.msra.mxu0 0.0
    %288 = vmatprep.subr.mxu0 0.0
    %289 = vmatpush2.msra.mxu0 0.0
    %290 = vmatprep.subr.mxu0 0.0
    %291 = vmatpush2.msra.mxu0 0.0
    %292 = vmatprep.subr.mxu0 0.0
    %293 = vmatpush2.msra.mxu0 0.0
    %294 = vmatprep.subr.mxu0 0.0
    %295 = vmatpush2.msra.mxu0 0.0
    %296 = vmatprep.subr.mxu0 0.0
    %297 = vmatpush2.msra.mxu0 0.0
    %298 = vmatprep.mubr.f32.mxu0 0.0
    %299 = vmatmul.mubr.f32.gmra.mxu0 %v133
    %v300 = vpop.f32.mrf.mxu0
    %v301 = vadd.f32 %v233, %v300
    %v302 = vpop.f32.mrf.mxu0
    %303 = vdwg.mxu0
    %v304 = vmax.f32 %v301, 0.0
    %v305 = vld [vmem:[#allocation2] sm:$0xff]
    %v306 = vld [vmem:[%s7] sm:$0xff]
    %v307 = vld [vmem:[%s7 + $0x8] sm:$0xff]
    %v308 = vld [vmem:[%s7 + $0x10] sm:$0xff]
    %v309 = vld [vmem:[%s7 + $0x18] sm:$0xff]
    %v310 = vld [vmem:[%s7 + $0x20] sm:$0xff]
    %v311 = vld [vmem:[%s7 + $0x28] sm:$0xff]
    %v312 = vld [vmem:[%s7 + $0x30] sm:$0xff]
    %v313 = vld [vmem:[%s7 + $0x38] sm:$0xff]
    %v314 = vld [vmem:[%s7 + $0x40] sm:$0xff]
    %v315 = vld [vmem:[%s7 + $0x48] sm:$0xff]
    %v316 = vld [vmem:[%s7 + $0x50] sm:$0xff]
    %v317 = vld [vmem:[%s7 + $0x58] sm:$0xff]
    %v318 = vld [vmem:[%s7 + $0x60] sm:$0xff]
    %v319 = vld [vmem:[%s7 + $0x68] sm:$0xff]
    %v320 = vld [vmem:[%s7 + $0x70] sm:$0xff]
    %v321 = vld [vmem:[%s7 + $0x78] sm:$0xff]
    %v322 = vlaneseq
    %v323 = vshrl.u32 %v322, 7
    %v324 = vsub.s32 0, %v323
    %v325 = vrot.slane %v225, %v324
    %326 = vmatprep.subr.mxu0 0.0
    %327 = vmatpush1.msra.mxu0 %v321
    %328 = vmatprep.subr.mxu0 0.0
    %329 = vmatpush1.msra.mxu0 %v320
    %330 = vmatprep.subr.mxu0 0.0
    %331 = vmatpush1.msra.mxu0 %v319
    %332 = vmatprep.subr.mxu0 0.0
    %333 = vmatpush1.msra.mxu0 %v318
    %334 = vmatprep.subr.mxu0 0.0
    %335 = vmatpush1.msra.mxu0 %v317
    %336 = vmatprep.subr.mxu0 0.0
    %337 = vmatpush1.msra.mxu0 %v316
    %338 = vmatprep.subr.mxu0 0.0
    %339 = vmatpush1.msra.mxu0 %v315
    %340 = vmatprep.subr.mxu0 0.0
    %341 = vmatpush1.msra.mxu0 %v314
    %342 = vmatprep.subr.mxu0 0.0
    %343 = vmatpush1.msra.mxu0 %v313
    %344 = vmatprep.subr.mxu0 0.0
    %345 = vmatpush1.msra.mxu0 %v312
    %346 = vmatprep.subr.mxu0 0.0
    %347 = vmatpush1.msra.mxu0 %v311
    %348 = vmatprep.subr.mxu0 0.0
    %349 = vmatpush1.msra.mxu0 %v310
    %350 = vmatprep.subr.mxu0 0.0
    %351 = vmatpush1.msra.mxu0 %v309
    %352 = vmatprep.subr.mxu0 0.0
    %353 = vmatpush1.msra.mxu0 %v308
    %354 = vmatprep.subr.mxu0 0.0
    %355 = vmatpush1.msra.mxu0 %v307
    %356 = vmatprep.subr.mxu0 0.0
    %357 = vmatpush1.msra.mxu0 %v306
    %358 = vmatprep.subr.mxu0 0.0
    %359 = vmatpush2.msra.mxu0 0.0
    %360 = vmatprep.subr.mxu0 0.0
    %361 = vmatpush2.msra.mxu0 0.0
    %362 = vmatprep.subr.mxu0 0.0
    %363 = vmatpush2.msra.mxu0 0.0
    %364 = vmatprep.subr.mxu0 0.0
    %365 = vmatpush2.msra.mxu0 0.0
    %366 = vmatprep.subr.mxu0 0.0
    %367 = vmatpush2.msra.mxu0 0.0
    %368 = vmatprep.subr.mxu0 0.0
    %369 = vmatpush2.msra.mxu0 0.0
    %370 = vmatprep.subr.mxu0 0.0
    %371 = vmatpush2.msra.mxu0 0.0
    %372 = vmatprep.subr.mxu0 0.0
    %373 = vmatpush2.msra.mxu0 0.0
    %374 = vmatprep.subr.mxu0 0.0
    %375 = vmatpush2.msra.mxu0 0.0
    %376 = vmatprep.subr.mxu0 0.0
    %377 = vmatpush2.msra.mxu0 0.0
    %378 = vmatprep.subr.mxu0 0.0
    %379 = vmatpush2.msra.mxu0 0.0
    %380 = vmatprep.subr.mxu0 0.0
    %381 = vmatpush2.msra.mxu0 0.0
    %382 = vmatprep.subr.mxu0 0.0
    %383 = vmatpush2.msra.mxu0 0.0
    %384 = vmatprep.subr.mxu0 0.0
    %385 = vmatpush2.msra.mxu0 0.0
    %386 = vmatprep.subr.mxu0 0.0
    %387 = vmatpush2.msra.mxu0 0.0
    %388 = vmatprep.subr.mxu0 0.0
    %389 = vmatpush2.msra.mxu0 0.0
    %390 = vmatprep.mubr.f32.mxu0 0.0
    %391 = vmatmul.mubr.f32.gmra.mxu0 %v305
    %v392 = vpop.f32.mrf.mxu0
    %v393 = vadd.f32 %v325, %v392
    %v394 = vpop.f32.mrf.mxu0
    %395 = vdwg.mxu0
    %v396 = vxor.u32 %v393, 2147483648
    %v397 = vmul.f32 %v396, 1.442695
    %v398 = vpow.pop %v397
    %v399 = vadd.f32 %v398, 1.0
    %v400 = vrcp.pop %v399
    %v401 = vmul.f32 1.0, %v400
    %v402 = vmul.f32 %v401, 2.0
    %v403 = vmul.f32 %v304, %v402
    %v404 = vld [vmem:[%s5 + $0x2] sm:$0x1]
    %v405 = vld [vmem:[%s5 + $0x3] sm:$0x1]
    %v406 = vld [vmem:[%s8] sm:$0xff]
    %v407 = vld [vmem:[%s8 + $0x8] sm:$0xff]
    %v408 = vld [vmem:[%s8 + $0x10] sm:$0xff]
    %v409 = vld [vmem:[%s8 + $0x18] sm:$0xff]
    %v410 = vlaneseq
    %v411 = vshrl.u32 %v410, 7
    %v412 = vsub.s32 0, %v411
    %v413 = vrot.slane %v404, %v412
    %v415 = vsel %vm57, %v403, 0
    %417 = vmatprep.subr.mxu0 0.0
    %418 = vmatpush1.msra.mxu0 0.0
    %419 = vmatprep.subr.mxu0 0.0
    %420 = vmatpush1.msra.mxu0 0.0
    %421 = vmatprep.subr.mxu0 0.0
    %422 = vmatpush1.msra.mxu0 0.0
    %423 = vmatprep.subr.mxu0 0.0
    %424 = vmatpush1.msra.mxu0 0.0
    %425 = vmatprep.subr.mxu0 0.0
    %426 = vmatpush1.msra.mxu0 0.0
    %427 = vmatprep.subr.mxu0 0.0
    %428 = vmatpush1.msra.mxu0 0.0
    %429 = vmatprep.subr.mxu0 0.0
    %430 = vmatpush1.msra.mxu0 0.0
    %431 = vmatprep.subr.mxu0 0.0
    %432 = vmatpush1.msra.mxu0 0.0
    %433 = vmatprep.subr.mxu0 0.0
    %434 = vmatpush1.msra.mxu0 0.0
    %435 = vmatprep.subr.mxu0 0.0
    %436 = vmatpush1.msra.mxu0 0.0
    %437 = vmatprep.subr.mxu0 0.0
    %438 = vmatpush1.msra.mxu0 0.0
    %439 = vmatprep.subr.mxu0 0.0
    %440 = vmatpush1.msra.mxu0 0.0
    %441 = vmatprep.subr.mxu0 0.0
    %442 = vmatpush1.msra.mxu0 %v409
    %443 = vmatprep.subr.mxu0 0.0
    %444 = vmatpush1.msra.mxu0 %v408
    %445 = vmatprep.subr.mxu0 0.0
    %446 = vmatpush1.msra.mxu0 %v407
    %447 = vmatprep.subr.mxu0 0.0
    %448 = vmatpush1.msra.mxu0 %v406
    %449 = vmatprep.subr.mxu0 0.0
    %450 = vmatpush2.msra.mxu0 0.0
    %451 = vmatprep.subr.mxu0 0.0
    %452 = vmatpush2.msra.mxu0 0.0
    %453 = vmatprep.subr.mxu0 0.0
    %454 = vmatpush2.msra.mxu0 0.0
    %455 = vmatprep.subr.mxu0 0.0
    %456 = vmatpush2.msra.mxu0 0.0
    %457 = vmatprep.subr.mxu0 0.0
    %458 = vmatpush2.msra.mxu0 0.0
    %459 = vmatprep.subr.mxu0 0.0
    %460 = vmatpush2.msra.mxu0 0.0
    %461 = vmatprep.subr.mxu0 0.0
    %462 = vmatpush2.msra.mxu0 0.0
    %463 = vmatprep.subr.mxu0 0.0
    %464 = vmatpush2.msra.mxu0 0.0
    %465 = vmatprep.subr.mxu0 0.0
    %466 = vmatpush2.msra.mxu0 0.0
    %467 = vmatprep.subr.mxu0 0.0
    %468 = vmatpush2.msra.mxu0 0.0
    %469 = vmatprep.subr.mxu0 0.0
    %470 = vmatpush2.msra.mxu0 0.0
    %471 = vmatprep.subr.mxu0 0.0
    %472 = vmatpush2.msra.mxu0 0.0
    %473 = vmatprep.subr.mxu0 0.0
    %474 = vmatpush2.msra.mxu0 0.0
    %475 = vmatprep.subr.mxu0 0.0
    %476 = vmatpush2.msra.mxu0 0.0
    %477 = vmatprep.subr.mxu0 0.0
    %478 = vmatpush2.msra.mxu0 0.0
    %479 = vmatprep.subr.mxu0 0.0
    %480 = vmatpush2.msra.mxu0 0.0
    %481 = vmatprep.mubr.f32.mxu0 0.0
    %482 = vmatmul.mubr.f32.gmra.mxu0 %v415
    %v483 = vpop.f32.mrf.mxu0
    %v484 = vadd.f32 %v413, %v483
    %v485 = vpop.f32.mrf.mxu0
    %486 = vdwg.mxu0
    %v487 = vmax.f32 %v484, 0.0
    %v488 = vld [vmem:[#allocation2 + $0x8] sm:$0xff]
    %v489 = vld [vmem:[%s9] sm:$0xff]
    %v490 = vld [vmem:[%s9 + $0x8] sm:$0xff]
    %v491 = vld [vmem:[%s9 + $0x10] sm:$0xff]
    %v492 = vld [vmem:[%s9 + $0x18] sm:$0xff]
    %v493 = vld [vmem:[%s9 + $0x20] sm:$0xff]
    %v494 = vld [vmem:[%s9 + $0x28] sm:$0xff]
    %v495 = vld [vmem:[%s9 + $0x30] sm:$0xff]
    %v496 = vld [vmem:[%s9 + $0x38] sm:$0xff]
    %v497 = vld [vmem:[%s9 + $0x40] sm:$0xff]
    %v498 = vld [vmem:[%s9 + $0x48] sm:$0xff]
    %v499 = vld [vmem:[%s9 + $0x50] sm:$0xff]
    %v500 = vld [vmem:[%s9 + $0x58] sm:$0xff]
    %v501 = vld [vmem:[%s9 + $0x60] sm:$0xff]
    %v502 = vld [vmem:[%s9 + $0x68] sm:$0xff]
    %v503 = vld [vmem:[%s9 + $0x70] sm:$0xff]
    %v504 = vld [vmem:[%s9 + $0x78] sm:$0xff]
    %v505 = vlaneseq
    %v506 = vshrl.u32 %v505, 7
    %v507 = vsub.s32 0, %v506
    %v508 = vrot.slane %v405, %v507
    %509 = vmatprep.subr.mxu0 0.0
    %510 = vmatpush1.msra.mxu0 %v504
    %511 = vmatprep.subr.mxu0 0.0
    %512 = vmatpush1.msra.mxu0 %v503
    %513 = vmatprep.subr.mxu0 0.0
    %514 = vmatpush1.msra.mxu0 %v502
    %515 = vmatprep.subr.mxu0 0.0
    %516 = vmatpush1.msra.mxu0 %v501
    %517 = vmatprep.subr.mxu0 0.0
    %518 = vmatpush1.msra.mxu0 %v500
    %519 = vmatprep.subr.mxu0 0.0
    %520 = vmatpush1.msra.mxu0 %v499
    %521 = vmatprep.subr.mxu0 0.0
    %522 = vmatpush1.msra.mxu0 %v498
    %523 = vmatprep.subr.mxu0 0.0
    %524 = vmatpush1.msra.mxu0 %v497
    %525 = vmatprep.subr.mxu0 0.0
    %526 = vmatpush1.msra.mxu0 %v496
    %527 = vmatprep.subr.mxu0 0.0
    %528 = vmatpush1.msra.mxu0 %v495
    %529 = vmatprep.subr.mxu0 0.0
    %530 = vmatpush1.msra.mxu0 %v494
    %531 = vmatprep.subr.mxu0 0.0
    %532 = vmatpush1.msra.mxu0 %v493
    %533 = vmatprep.subr.mxu0 0.0
    %534 = vmatpush1.msra.mxu0 %v492
    %535 = vmatprep.subr.mxu0 0.0
    %536 = vmatpush1.msra.mxu0 %v491
    %537 = vmatprep.subr.mxu0 0.0
    %538 = vmatpush1.msra.mxu0 %v490
    %539 = vmatprep.subr.mxu0 0.0
    %540 = vmatpush1.msra.mxu0 %v489
    %541 = vmatprep.subr.mxu0 0.0
    %542 = vmatpush2.msra.mxu0 0.0
    %543 = vmatprep.subr.mxu0 0.0
    %544 = vmatpush2.msra.mxu0 0.0
    %545 = vmatprep.subr.mxu0 0.0
    %546 = vmatpush2.msra.mxu0 0.0
    %547 = vmatprep.subr.mxu0 0.0
    %548 = vmatpush2.msra.mxu0 0.0
    %549 = vmatprep.subr.mxu0 0.0
    %550 = vmatpush2.msra.mxu0 0.0
    %551 = vmatprep.subr.mxu0 0.0
    %552 = vmatpush2.msra.mxu0 0.0
    %553 = vmatprep.subr.mxu0 0.0
    %554 = vmatpush2.msra.mxu0 0.0
    %555 = vmatprep.subr.mxu0 0.0
    %556 = vmatpush2.msra.mxu0 0.0
    %557 = vmatprep.subr.mxu0 0.0
    %558 = vmatpush2.msra.mxu0 0.0
    %559 = vmatprep.subr.mxu0 0.0
    %560 = vmatpush2.msra.mxu0 0.0
    %561 = vmatprep.subr.mxu0 0.0
    %562 = vmatpush2.msra.mxu0 0.0
    %563 = vmatprep.subr.mxu0 0.0
    %564 = vmatpush2.msra.mxu0 0.0
    %565 = vmatprep.subr.mxu0 0.0
    %566 = vmatpush2.msra.mxu0 0.0
    %567 = vmatprep.subr.mxu0 0.0
    %568 = vmatpush2.msra.mxu0 0.0
    %569 = vmatprep.subr.mxu0 0.0
    %570 = vmatpush2.msra.mxu0 0.0
    %571 = vmatprep.subr.mxu0 0.0
    %572 = vmatpush2.msra.mxu0 0.0
    %573 = vmatprep.mubr.f32.mxu0 0.0
    %574 = vmatmul.mubr.f32.gmra.mxu0 %v488
    %v575 = vpop.f32.mrf.mxu0
    %v576 = vadd.f32 %v508, %v575
    %v577 = vpop.f32.mrf.mxu0
    %578 = vdwg.mxu0
    %v579 = vxor.u32 %v576, 2147483648
    %v580 = vmul.f32 %v579, 1.442695
    %v581 = vpow.pop %v580
    %v582 = vadd.f32 %v581, 1.0
    %v583 = vrcp.pop %v582
    %v584 = vmul.f32 1.0, %v583
    %v585 = vmul.f32 %v584, 2.0
    %v586 = vmul.f32 %v487, %v585
    %v587 = vld [vmem:[%s5 + $0x4] sm:$0x1]
    %v588 = vld [vmem:[%s10] sm:$0xff]
    %v589 = vld [vmem:[%s10 + $0x8] sm:$0xff]
    %v590 = vld [vmem:[%s10 + $0x10] sm:$0xff]
    %v591 = vld [vmem:[%s10 + $0x18] sm:$0xff]
    %v592 = vlaneseq
    %v593 = vshrl.u32 %v592, 7
    %v594 = vsub.s32 0, %v593
    %v595 = vrot.slane %v587, %v594
    %v597 = vsel %vm57, %v586, 0
    %599 = vmatprep.subr.mxu0 0.0
    %600 = vmatpush1.msra.mxu0 0.0
    %601 = vmatprep.subr.mxu0 0.0
    %602 = vmatpush1.msra.mxu0 0.0
    %603 = vmatprep.subr.mxu0 0.0
    %604 = vmatpush1.msra.mxu0 0.0
    %605 = vmatprep.subr.mxu0 0.0
    %606 = vmatpush1.msra.mxu0 0.0
    %607 = vmatprep.subr.mxu0 0.0
    %608 = vmatpush1.msra.mxu0 0.0
    %609 = vmatprep.subr.mxu0 0.0
    %610 = vmatpush1.msra.mxu0 0.0
    %611 = vmatprep.subr.mxu0 0.0
    %612 = vmatpush1.msra.mxu0 0.0
    %613 = vmatprep.subr.mxu0 0.0
    %614 = vmatpush1.msra.mxu0 0.0
    %615 = vmatprep.subr.mxu0 0.0
    %616 = vmatpush1.msra.mxu0 0.0
    %617 = vmatprep.subr.mxu0 0.0
    %618 = vmatpush1.msra.mxu0 0.0
    %619 = vmatprep.subr.mxu0 0.0
    %620 = vmatpush1.msra.mxu0 0.0
    %621 = vmatprep.subr.mxu0 0.0
    %622 = vmatpush1.msra.mxu0 0.0
    %623 = vmatprep.subr.mxu0 0.0
    %624 = vmatpush1.msra.mxu0 %v591
    %625 = vmatprep.subr.mxu0 0.0
    %626 = vmatpush1.msra.mxu0 %v590
    %627 = vmatprep.subr.mxu0 0.0
    %628 = vmatpush1.msra.mxu0 %v589
    %629 = vmatprep.subr.mxu0 0.0
    %630 = vmatpush1.msra.mxu0 %v588
    %631 = vmatprep.subr.mxu0 0.0
    %632 = vmatpush2.msra.mxu0 0.0
    %633 = vmatprep.subr.mxu0 0.0
    %634 = vmatpush2.msra.mxu0 0.0
    %635 = vmatprep.subr.mxu0 0.0
    %636 = vmatpush2.msra.mxu0 0.0
    %637 = vmatprep.subr.mxu0 0.0
    %638 = vmatpush2.msra.mxu0 0.0
    %639 = vmatprep.subr.mxu0 0.0
    %640 = vmatpush2.msra.mxu0 0.0
    %641 = vmatprep.subr.mxu0 0.0
    %642 = vmatpush2.msra.mxu0 0.0
    %643 = vmatprep.subr.mxu0 0.0
    %644 = vmatpush2.msra.mxu0 0.0
    %645 = vmatprep.subr.mxu0 0.0
    %646 = vmatpush2.msra.mxu0 0.0
    %647 = vmatprep.subr.mxu0 0.0
    %648 = vmatpush2.msra.mxu0 0.0
    %649 = vmatprep.subr.mxu0 0.0
    %650 = vmatpush2.msra.mxu0 0.0
    %651 = vmatprep.subr.mxu0 0.0
    %652 = vmatpush2.msra.mxu0 0.0
    %653 = vmatprep.subr.mxu0 0.0
    %654 = vmatpush2.msra.mxu0 0.0
    %655 = vmatprep.subr.mxu0 0.0
    %656 = vmatpush2.msra.mxu0 0.0
    %657 = vmatprep.subr.mxu0 0.0
    %658 = vmatpush2.msra.mxu0 0.0
    %659 = vmatprep.subr.mxu0 0.0
    %660 = vmatpush2.msra.mxu0 0.0
    %661 = vmatprep.subr.mxu0 0.0
    %662 = vmatpush2.msra.mxu0 0.0
    %663 = vmatprep.mubr.f32.mxu0 0.0
    %664 = vmatmul.mubr.f32.gmra.mxu0 %v597
    %v665 = vpop.f32.mrf.mxu0
    %v666 = vadd.f32 %v595, %v665
    %v667 = vpop.f32.mrf.mxu0
    %668 = vdwg.mxu0
    %669 = vst [vmem:[#allocation3] sm:$0xff] %v666
    // Predicated region
    $region46: #{tpu_custom_call.1} parent=1 // pred_check
      _
    $region47: #{tpu_custom_call.1} parent=1 // pred_check_branch
      %671 = sbr.rel (0) target = $region49
    $region48: #{tpu_custom_call.1} parent=1 // pred_region
      %s673 = ssub.s32 128, 128
      %674 = vsyncadd [#allocation4], %s673
      %s676 = sshll.u32 [#allocation3], 4
      %s677 = int_to_ptr.vmem [resolvable:$true] %s676
      %679 = dma.vmem_to_hbm [thread:$0]  %s677, 128, %s11, [#allocation4]
    $region49: #{tpu_custom_call.1} parent=1 // pred_fallthru
      _
    // Predicated region
    $region50: #{tpu_custom_call.1} parent=1 // pred_check
      _
    $region51: #{tpu_custom_call.1} parent=1 // pred_check_branch
      %681 = sbr.rel (0) target = $region53
    $region52: #{tpu_custom_call.1} parent=1 // pred_region
      %682 = dma.done [#allocation4], 128
    $region53: #{tpu_custom_call.1} parent=1 // pred_fallthru
      _
    %683 = vsyncpa [#allocation4], 1

// kernel: tpu_custom_call.1
$region0: #{tpu_custom_call.1}
  #allocation0 [shape = 'u32[]', space=smem, size = 0x4, offset = 0x4, fixed_abs, tag = 'smem constant byte address 0x4 - core index']
  #allocation1 [shape = 'u32[144,128]{1,0:T(1,128)}', space=vmem, size = 0x12000, scoped, tag = 'internal scratch']
  #allocation2 [shape = 'f32[8,256]{1,0:T(8,128)}', space=vmem, size = 0x2000, scoped, tag = 'scratch operand']
  %s0 = inlined_call_operand.vmem [shape: f32[8,32], index: 0, kind: input, shape index: {}]
  %s1 = inlined_call_operand.vmem [shape: f32[8,32], index: 1, kind: input, shape index: {}]
  %s2 = inlined_call_operand.vmem [shape: f32[32,256], index: 2, kind: input, shape index: {}]
  %s3 = inlined_call_operand.vmem [shape: f32[32,256], index: 3, kind: input, shape index: {}]
  %s4 = inlined_call_operand.vmem [shape: f32[1,256], index: 4, kind: input, shape index: {}]
  %s5 = inlined_call_operand.vmem [shape: f32[5,128], index: 5, kind: input, shape index: {}]
  %s6 = inlined_call_operand.vmem [shape: f32[32,32], index: 6, kind: input, shape index: {}]
  %s7 = inlined_call_operand.vmem [shape: f32[128,32], index: 7, kind: input, shape index: {}]
  %s8 = inlined_call_operand.vmem [shape: f32[32,32], index: 8, kind: input, shape index: {}]
  %s9 = inlined_call_operand.vmem [shape: f32[128,32], index: 9, kind: input, shape index: {}]
  %s10 = inlined_call_operand.vmem [shape: f32[32,128], index: 10, kind: input, shape index: {}]
  %s11 = inlined_call_operand.hbm [shape: f32[8,128], index: 11, kind: output, shape index: {}]
  %s12 = sld [smem:[#allocation0]]
  $region54: #{tpu_custom_call.1} parent=0
    _
  %s14 = ssub.s32 1, %s12
  %s15 = scalar_select 0, %s14, %s12
  $region1: #{tpu_custom_call.1} parent=0
    #allocation3 [shape = 'u8[4096]{0}', space=vmem, size = 0x1000, scoped, tag = 'output window, operand 0, single buffered']
    #allocation4 [shape = 's32[1]{0}', space=sflag, size = 0x4, scoped, tag = 'scoped memory for tpu_custom_call.1']
    %16 = vsyncpa [#allocation4], 0
    // Predicated region
    $region2: #{tpu_custom_call.1} parent=1 // pred_check
      _
    $region3: #{tpu_custom_call.1} parent=1 // pred_check_branch
      %18 = sbr.rel (0) target = $region5
    $region4: #{tpu_custom_call.1} parent=1 // pred_region
      _
    $region5: #{tpu_custom_call.1} parent=1 // pred_fallthru
      _
    // Predicated region
    $region6: #{tpu_custom_call.1} parent=1 // pred_check
      _
    $region7: #{tpu_custom_call.1} parent=1 // pred_check_branch
      %20 = sbr.rel (0) target = $region9
    $region8: #{tpu_custom_call.1} parent=1 // pred_region
      _
    $region9: #{tpu_custom_call.1} parent=1 // pred_fallthru
      _
    // Predicated region
    $region10: #{tpu_custom_call.1} parent=1 // pred_check
      _
    $region11: #{tpu_custom_call.1} parent=1 // pred_check_branch
      %22 = sbr.rel (0) target = $region13
    $region12: #{tpu_custom_call.1} parent=1 // pred_region
      _
    $region13: #{tpu_custom_call.1} parent=1 // pred_fallthru
      _
    // Predicated region
    $region14: #{tpu_custom_call.1} parent=1 // pred_check
      _
    $region15: #{tpu_custom_call.1} parent=1 // pred_check_branch
      %24 = sbr.rel (0) target = $region17
    $region16: #{tpu_custom_call.1} parent=1 // pred_region
      _
    $region17: #{tpu_custom_call.1} parent=1 // pred_fallthru
      _
    // Predicated region
    $region18: #{tpu_custom_call.1} parent=1 // pred_check
      _
    $region19: #{tpu_custom_call.1} parent=1 // pred_check_branch
      %26 = sbr.rel (0) target = $region21
    $region20: #{tpu_custom_call.1} parent=1 // pred_region
      _
    $region21: #{tpu_custom_call.1} parent=1 // pred_fallthru
      _
    // Predicated region
    $region22: #{tpu_custom_call.1} parent=1 // pred_check
      _
    $region23: #{tpu_custom_call.1} parent=1 // pred_check_branch
      %28 = sbr.rel (0) target = $region25
    $region24: #{tpu_custom_call.1} parent=1 // pred_region
      _
    $region25: #{tpu_custom_call.1} parent=1 // pred_fallthru
      _
    // Predicated region
    $region26: #{tpu_custom_call.1} parent=1 // pred_check
      _
    $region27: #{tpu_custom_call.1} parent=1 // pred_check_branch
      %30 = sbr.rel (0) target = $region29
    $region28: #{tpu_custom_call.1} parent=1 // pred_region
      _
    $region29: #{tpu_custom_call.1} parent=1 // pred_fallthru
      _
    // Predicated region
    $region30: #{tpu_custom_call.1} parent=1 // pred_check
      _
    $region31: #{tpu_custom_call.1} parent=1 // pred_check_branch
      %32 = sbr.rel (0) target = $region33
    $region32: #{tpu_custom_call.1} parent=1 // pred_region
      _
    $region33: #{tpu_custom_call.1} parent=1 // pred_fallthru
      _
    // Predicated region
    $region34: #{tpu_custom_call.1} parent=1 // pred_check
      _
    $region35: #{tpu_custom_call.1} parent=1 // pred_check_branch
      %34 = sbr.rel (0) target = $region37
    $region36: #{tpu_custom_call.1} parent=1 // pred_region
      _
    $region37: #{tpu_custom_call.1} parent=1 // pred_fallthru
      _
    // Predicated region
    $region38: #{tpu_custom_call.1} parent=1 // pred_check
      _
    $region39: #{tpu_custom_call.1} parent=1 // pred_check_branch
      %36 = sbr.rel (0) target = $region41
    $region40: #{tpu_custom_call.1} parent=1 // pred_region
      _
    $region41: #{tpu_custom_call.1} parent=1 // pred_fallthru
      _
    // Predicated region
    $region42: #{tpu_custom_call.1} parent=1 // pred_check
      _
    $region43: #{tpu_custom_call.1} parent=1 // pred_check_branch
      %38 = sbr.rel (0) target = $region45
    $region44: #{tpu_custom_call.1} parent=1 // pred_region
      _
    $region45: #{tpu_custom_call.1} parent=1 // pred_fallthru
      _
    %v39 = vld [vmem:[%s0] sm:$0xff]
    %v40 = vld [vmem:[%s1] sm:$0xff]
    %v41 = vld [vmem:[%s2] sm:$0xff]
    %v42 = vld [vmem:[%s2 + $0x8] sm:$0xff]
    %v43 = vld [vmem:[%s2 + $0x10] sm:$0xff]
    %v44 = vld [vmem:[%s2 + $0x18] sm:$0xff]
    %v45 = vld [vmem:[%s2 + $0x20] sm:$0xff]
    %v46 = vld [vmem:[%s2 + $0x28] sm:$0xff]
    %v47 = vld [vmem:[%s2 + $0x30] sm:$0xff]
    %v48 = vld [vmem:[%s2 + $0x38] sm:$0xff]
    %v49 = vld [vmem:[%s3] sm:$0xff]
    %v50 = vld [vmem:[%s3 + $0x8] sm:$0xff]
    %v51 = vld [vmem:[%s3 + $0x10] sm:$0xff]
    %v52 = vld [vmem:[%s3 + $0x18] sm:$0xff]
    %v53 = vld [vmem:[%s3 + $0x20] sm:$0xff]
    %v54 = vld [vmem:[%s3 + $0x28] sm:$0xff]
    %v55 = vld [vmem:[%s3 + $0x30] sm:$0xff]
    %v56 = vld [vmem:[%s3 + $0x38] sm:$0xff]
    %vm57 = vcmask 261120
    %v59 = vsel %vm57, %v40, 0
    %61 = vmatprep.subr.mxu0 0.0
    %62 = vmatpush1.msra.mxu0 0.0
    %63 = vmatprep.subr.mxu0 0.0
    %64 = vmatpush1.msra.mxu0 0.0
    %65 = vmatprep.subr.mxu0 0.0
    %66 = vmatpush1.msra.mxu0 0.0
    %67 = vmatprep.subr.mxu0 0.0
    %68 = vmatpush1.msra.mxu0 0.0
    %69 = vmatprep.subr.mxu0 0.0
    %70 = vmatpush1.msra.mxu0 0.0
    %71 = vmatprep.subr.mxu0 0.0
    %72 = vmatpush1.msra.mxu0 0.0
    %73 = vmatprep.subr.mxu0 0.0
    %74 = vmatpush1.msra.mxu0 0.0
    %75 = vmatprep.subr.mxu0 0.0
    %76 = vmatpush1.msra.mxu0 0.0
    %77 = vmatprep.subr.mxu0 0.0
    %78 = vmatpush1.msra.mxu0 0.0
    %79 = vmatprep.subr.mxu0 0.0
    %80 = vmatpush1.msra.mxu0 0.0
    %81 = vmatprep.subr.mxu0 0.0
    %82 = vmatpush1.msra.mxu0 0.0
    %83 = vmatprep.subr.mxu0 0.0
    %84 = vmatpush1.msra.mxu0 0.0
    %85 = vmatprep.subr.mxu0 %v56
    %86 = vmatpush1.msra.mxu0 %v55
    %87 = vmatprep.subr.mxu0 %v54
    %88 = vmatpush1.msra.mxu0 %v53
    %89 = vmatprep.subr.mxu0 %v52
    %90 = vmatpush1.msra.mxu0 %v51
    %91 = vmatprep.subr.mxu0 %v50
    %92 = vmatpush1.msra.mxu0 %v49
    %93 = vmatprep.subr.mxu0 0.0
    %94 = vmatpush2.msra.mxu0 0.0
    %95 = vmatprep.subr.mxu0 0.0
    %96 = vmatpush2.msra.mxu0 0.0
    %97 = vmatprep.subr.mxu0 0.0
    %98 = vmatpush2.msra.mxu0 0.0
    %99 = vmatprep.subr.mxu0 0.0
    %100 = vmatpush2.msra.mxu0 0.0
    %101 = vmatprep.subr.mxu0 0.0
    %102 = vmatpush2.msra.mxu0 0.0
    %103 = vmatprep.subr.mxu0 0.0
    %104 = vmatpush2.msra.mxu0 0.0
    %105 = vmatprep.subr.mxu0 0.0
    %106 = vmatpush2.msra.mxu0 0.0
    %107 = vmatprep.subr.mxu0 0.0
    %108 = vmatpush2.msra.mxu0 0.0
    %109 = vmatprep.subr.mxu0 0.0
    %110 = vmatpush2.msra.mxu0 0.0
    %111 = vmatprep.subr.mxu0 0.0
    %112 = vmatpush2.msra.mxu0 0.0
    %113 = vmatprep.subr.mxu0 0.0
    %114 = vmatpush2.msra.mxu0 0.0
    %115 = vmatprep.subr.mxu0 0.0
    %116 = vmatpush2.msra.mxu0 0.0
    %117 = vmatprep.subr.mxu0 0.0
    %118 = vmatpush2.msra.mxu0 0.0
    %119 = vmatprep.subr.mxu0 0.0
    %120 = vmatpush2.msra.mxu0 0.0
    %121 = vmatprep.subr.mxu0 0.0
    %122 = vmatpush2.msra.mxu0 0.0
    %123 = vmatprep.subr.mxu0 0.0
    %124 = vmatpush2.msra.mxu0 0.0
    %125 = vmatprep.mubr.f32.mxu0 0.0
    %126 = vmatmul.mubr.f32.gmra.mxu0 %v59
    %v127 = vpop.f32.mrf.mxu0
    %v128 = vadd.f32 0.0, %v127
    %v129 = vpop.f32.mrf.mxu0
    %v130 = vadd.f32 0.0, %v129
    %131 = vdwg.mxu0
    %v133 = vsel %vm57, %v39, 0
    %135 = vmatprep.subr.mxu0 0.0
    %136 = vmatpush1.msra.mxu0 0.0
    %137 = vmatprep.subr.mxu0 0.0
    %138 = vmatpush1.msra.mxu0 0.0
    %139 = vmatprep.subr.mxu0 0.0
    %140 = vmatpush1.msra.mxu0 0.0
    %141 = vmatprep.subr.mxu0 0.0
    %142 = vmatpush1.msra.mxu0 0.0
    %143 = vmatprep.subr.mxu0 0.0
    %144 = vmatpush1.msra.mxu0 0.0
    %145 = vmatprep.subr.mxu0 0.0
    %146 = vmatpush1.msra.mxu0 0.0
    %147 = vmatprep.subr.mxu0 0.0
    %148 = vmatpush1.msra.mxu0 0.0
    %149 = vmatprep.subr.mxu0 0.0
    %150 = vmatpush1.msra.mxu0 0.0
    %151 = vmatprep.subr.mxu0 0.0
    %152 = vmatpush1.msra.mxu0 0.0
    %153 = vmatprep.subr.mxu0 0.0
    %154 = vmatpush1.msra.mxu0 0.0
    %155 = vmatprep.subr.mxu0 0.0
    %156 = vmatpush1.msra.mxu0 0.0
    %157 = vmatprep.subr.mxu0 0.0
    %158 = vmatpush1.msra.mxu0 0.0
    %159 = vmatprep.subr.mxu0 %v48
    %160 = vmatpush1.msra.mxu0 %v47
    %161 = vmatprep.subr.mxu0 %v46
    %162 = vmatpush1.msra.mxu0 %v45
    %163 = vmatprep.subr.mxu0 %v44
    %164 = vmatpush1.msra.mxu0 %v43
    %165 = vmatprep.subr.mxu0 %v42
    %166 = vmatpush1.msra.mxu0 %v41
    %167 = vmatprep.subr.mxu0 0.0
    %168 = vmatpush2.msra.mxu0 0.0
    %169 = vmatprep.subr.mxu0 0.0
    %170 = vmatpush2.msra.mxu0 0.0
    %171 = vmatprep.subr.mxu0 0.0
    %172 = vmatpush2.msra.mxu0 0.0
    %173 = vmatprep.subr.mxu0 0.0
    %174 = vmatpush2.msra.mxu0 0.0
    %175 = vmatprep.subr.mxu0 0.0
    %176 = vmatpush2.msra.mxu0 0.0
    %177 = vmatprep.subr.mxu0 0.0
    %178 = vmatpush2.msra.mxu0 0.0
    %179 = vmatprep.subr.mxu0 0.0
    %180 = vmatpush2.msra.mxu0 0.0
    %181 = vmatprep.subr.mxu0 0.0
    %182 = vmatpush2.msra.mxu0 0.0
    %183 = vmatprep.subr.mxu0 0.0
    %184 = vmatpush2.msra.mxu0 0.0
    %185 = vmatprep.subr.mxu0 0.0
    %186 = vmatpush2.msra.mxu0 0.0
    %187 = vmatprep.subr.mxu0 0.0
    %188 = vmatpush2.msra.mxu0 0.0
    %189 = vmatprep.subr.mxu0 0.0
    %190 = vmatpush2.msra.mxu0 0.0
    %191 = vmatprep.subr.mxu0 0.0
    %192 = vmatpush2.msra.mxu0 0.0
    %193 = vmatprep.subr.mxu0 0.0
    %194 = vmatpush2.msra.mxu0 0.0
    %195 = vmatprep.subr.mxu0 0.0
    %196 = vmatpush2.msra.mxu0 0.0
    %197 = vmatprep.subr.mxu0 0.0
    %198 = vmatpush2.msra.mxu0 0.0
    %199 = vmatprep.mubr.f32.mxu0 0.0
    %200 = vmatmul.mubr.f32.gmra.mxu0 %v133
    %v201 = vpop.f32.mrf.mxu0
    %v202 = vadd.f32 %v128, %v201
    %v203 = vpop.f32.mrf.mxu0
    %v204 = vadd.f32 %v130, %v203
    %205 = vdwg.mxu0
    %v206 = vld [vmem:[%s4] sm:$0x3]
    %v208 = vlaneseq
    %v209 = vshrl.u32 %v208, 7
    %v210 = vsub.s32 0, %v209
    %v211 = vrot.slane %v206, %v210
    %v212 = vlaneseq
    %v213 = vshrl.u32 %v212, 7
    %v214 = vsub.s32 1, %v213
    %v215 = vrot.slane %v206, %v214
    %v218 = vadd.f32 %v202, %v211
    %v219 = vadd.f32 %v204, %v215
    %v220 = vmax.f32 %v218, 0.0
    %v221 = vmax.f32 %v219, 0.0
    %222 = vst [vmem:[#allocation2] sm:$0xff] %v220
    %223 = vst [vmem:[#allocation2 + $0x8] sm:$0xff] %v221
    %v224 = vld [vmem:[%s5] sm:$0x1]
    %v225 = vld [vmem:[%s5 + $0x1] sm:$0x1]
    %v226 = vld [vmem:[%s6] sm:$0xff]
    %v227 = vld [vmem:[%s6 + $0x8] sm:$0xff]
    %v228 = vld [vmem:[%s6 + $0x10] sm:$0xff]
    %v229 = vld [vmem:[%s6 + $0x18] sm:$0xff]
    %v230 = vlaneseq
    %v231 = vshrl.u32 %v230, 7
    %v232 = vsub.s32 0, %v231
    %v233 = vrot.slane %v224, %v232
    %234 = vmatprep.subr.mxu0 0.0
    %235 = vmatpush1.msra.mxu0 0.0
    %236 = vmatprep.subr.mxu0 0.0
    %237 = vmatpush1.msra.mxu0 0.0
    %238 = vmatprep.subr.mxu0 0.0
    %239 = vmatpush1.msra.mxu0 0.0
    %240 = vmatprep.subr.mxu0 0.0
    %241 = vmatpush1.msra.mxu0 0.0
    %242 = vmatprep.subr.mxu0 0.0
    %243 = vmatpush1.msra.mxu0 0.0
    %244 = vmatprep.subr.mxu0 0.0
    %245 = vmatpush1.msra.mxu0 0.0
    %246 = vmatprep.subr.mxu0 0.0
    %247 = vmatpush1.msra.mxu0 0.0
    %248 = vmatprep.subr.mxu0 0.0
    %249 = vmatpush1.msra.mxu0 0.0
    %250 = vmatprep.subr.mxu0 0.0
    %251 = vmatpush1.msra.mxu0 0.0
    %252 = vmatprep.subr.mxu0 0.0
    %253 = vmatpush1.msra.mxu0 0.0
    %254 = vmatprep.subr.mxu0 0.0
    %255 = vmatpush1.msra.mxu0 0.0
    %256 = vmatprep.subr.mxu0 0.0
    %257 = vmatpush1.msra.mxu0 0.0
    %258 = vmatprep.subr.mxu0 0.0
    %259 = vmatpush1.msra.mxu0 %v229
    %260 = vmatprep.subr.mxu0 0.0
    %261 = vmatpush1.msra.mxu0 %v228
    %262 = vmatprep.subr.mxu0 0.0
    %263 = vmatpush1.msra.mxu0 %v227
    %264 = vmatprep.subr.mxu0 0.0
    %265 = vmatpush1.msra.mxu0 %v226
    %266 = vmatprep.subr.mxu0 0.0
    %267 = vmatpush2.msra.mxu0 0.0
    %268 = vmatprep.subr.mxu0 0.0
    %269 = vmatpush2.msra.mxu0 0.0
    %270 = vmatprep.subr.mxu0 0.0
    %271 = vmatpush2.msra.mxu0 0.0
    %272 = vmatprep.subr.mxu0 0.0
    %273 = vmatpush2.msra.mxu0 0.0
    %274 = vmatprep.subr.mxu0 0.0
    %275 = vmatpush2.msra.mxu0 0.0
    %276 = vmatprep.subr.mxu0 0.0
    %277 = vmatpush2.msra.mxu0 0.0
    %278 = vmatprep.subr.mxu0 0.0
    %279 = vmatpush2.msra.mxu0 0.0
    %280 = vmatprep.subr.mxu0 0.0
    %281 = vmatpush2.msra.mxu0 0.0
    %282 = vmatprep.subr.mxu0 0.0
    %283 = vmatpush2.msra.mxu0 0.0
    %284 = vmatprep.subr.mxu0 0.0
    %285 = vmatpush2.msra.mxu0 0.0
    %286 = vmatprep.subr.mxu0 0.0
    %287 = vmatpush2.msra.mxu0 0.0
    %288 = vmatprep.subr.mxu0 0.0
    %289 = vmatpush2.msra.mxu0 0.0
    %290 = vmatprep.subr.mxu0 0.0
    %291 = vmatpush2.msra.mxu0 0.0
    %292 = vmatprep.subr.mxu0 0.0
    %293 = vmatpush2.msra.mxu0 0.0
    %294 = vmatprep.subr.mxu0 0.0
    %295 = vmatpush2.msra.mxu0 0.0
    %296 = vmatprep.subr.mxu0 0.0
    %297 = vmatpush2.msra.mxu0 0.0
    %298 = vmatprep.mubr.f32.mxu0 0.0
    %299 = vmatmul.mubr.f32.gmra.mxu0 %v133
    %v300 = vpop.f32.mrf.mxu0
    %v301 = vadd.f32 %v233, %v300
    %v302 = vpop.f32.mrf.mxu0
    %303 = vdwg.mxu0
    %v304 = vmax.f32 %v301, 0.0
    %v305 = vld [vmem:[#allocation2] sm:$0xff]
    %v306 = vld [vmem:[%s7] sm:$0xff]
    %v307 = vld [vmem:[%s7 + $0x8] sm:$0xff]
    %v308 = vld [vmem:[%s7 + $0x10] sm:$0xff]
    %v309 = vld [vmem:[%s7 + $0x18] sm:$0xff]
    %v310 = vld [vmem:[%s7 + $0x20] sm:$0xff]
    %v311 = vld [vmem:[%s7 + $0x28] sm:$0xff]
    %v312 = vld [vmem:[%s7 + $0x30] sm:$0xff]
    %v313 = vld [vmem:[%s7 + $0x38] sm:$0xff]
    %v314 = vld [vmem:[%s7 + $0x40] sm:$0xff]
    %v315 = vld [vmem:[%s7 + $0x48] sm:$0xff]
    %v316 = vld [vmem:[%s7 + $0x50] sm:$0xff]
    %v317 = vld [vmem:[%s7 + $0x58] sm:$0xff]
    %v318 = vld [vmem:[%s7 + $0x60] sm:$0xff]
    %v319 = vld [vmem:[%s7 + $0x68] sm:$0xff]
    %v320 = vld [vmem:[%s7 + $0x70] sm:$0xff]
    %v321 = vld [vmem:[%s7 + $0x78] sm:$0xff]
    %v322 = vlaneseq
    %v323 = vshrl.u32 %v322, 7
    %v324 = vsub.s32 0, %v323
    %v325 = vrot.slane %v225, %v324
    %326 = vmatprep.subr.mxu0 0.0
    %327 = vmatpush1.msra.mxu0 %v321
    %328 = vmatprep.subr.mxu0 0.0
    %329 = vmatpush1.msra.mxu0 %v320
    %330 = vmatprep.subr.mxu0 0.0
    %331 = vmatpush1.msra.mxu0 %v319
    %332 = vmatprep.subr.mxu0 0.0
    %333 = vmatpush1.msra.mxu0 %v318
    %334 = vmatprep.subr.mxu0 0.0
    %335 = vmatpush1.msra.mxu0 %v317
    %336 = vmatprep.subr.mxu0 0.0
    %337 = vmatpush1.msra.mxu0 %v316
    %338 = vmatprep.subr.mxu0 0.0
    %339 = vmatpush1.msra.mxu0 %v315
    %340 = vmatprep.subr.mxu0 0.0
    %341 = vmatpush1.msra.mxu0 %v314
    %342 = vmatprep.subr.mxu0 0.0
    %343 = vmatpush1.msra.mxu0 %v313
    %344 = vmatprep.subr.mxu0 0.0
    %345 = vmatpush1.msra.mxu0 %v312
    %346 = vmatprep.subr.mxu0 0.0
    %347 = vmatpush1.msra.mxu0 %v311
    %348 = vmatprep.subr.mxu0 0.0
    %349 = vmatpush1.msra.mxu0 %v310
    %350 = vmatprep.subr.mxu0 0.0
    %351 = vmatpush1.msra.mxu0 %v309
    %352 = vmatprep.subr.mxu0 0.0
    %353 = vmatpush1.msra.mxu0 %v308
    %354 = vmatprep.subr.mxu0 0.0
    %355 = vmatpush1.msra.mxu0 %v307
    %356 = vmatprep.subr.mxu0 0.0
    %357 = vmatpush1.msra.mxu0 %v306
    %358 = vmatprep.subr.mxu0 0.0
    %359 = vmatpush2.msra.mxu0 0.0
    %360 = vmatprep.subr.mxu0 0.0
    %361 = vmatpush2.msra.mxu0 0.0
    %362 = vmatprep.subr.mxu0 0.0
    %363 = vmatpush2.msra.mxu0 0.0
    %364 = vmatprep.subr.mxu0 0.0
    %365 = vmatpush2.msra.mxu0 0.0
    %366 = vmatprep.subr.mxu0 0.0
    %367 = vmatpush2.msra.mxu0 0.0
    %368 = vmatprep.subr.mxu0 0.0
    %369 = vmatpush2.msra.mxu0 0.0
    %370 = vmatprep.subr.mxu0 0.0
    %371 = vmatpush2.msra.mxu0 0.0
    %372 = vmatprep.subr.mxu0 0.0
    %373 = vmatpush2.msra.mxu0 0.0
    %374 = vmatprep.subr.mxu0 0.0
    %375 = vmatpush2.msra.mxu0 0.0
    %376 = vmatprep.subr.mxu0 0.0
    %377 = vmatpush2.msra.mxu0 0.0
    %378 = vmatprep.subr.mxu0 0.0
    %379 = vmatpush2.msra.mxu0 0.0
    %380 = vmatprep.subr.mxu0 0.0
    %381 = vmatpush2.msra.mxu0 0.0
    %382 = vmatprep.subr.mxu0 0.0
    %383 = vmatpush2.msra.mxu0 0.0
    %384 = vmatprep.subr.mxu0 0.0
    %385 = vmatpush2.msra.mxu0 0.0
    %386 = vmatprep.subr.mxu0 0.0
    %387 = vmatpush2.msra.mxu0 0.0
    %388 = vmatprep.subr.mxu0 0.0
    %389 = vmatpush2.msra.mxu0 0.0
    %390 = vmatprep.mubr.f32.mxu0 0.0
    %391 = vmatmul.mubr.f32.gmra.mxu0 %v305
    %v392 = vpop.f32.mrf.mxu0
    %v393 = vadd.f32 %v325, %v392
    %v394 = vpop.f32.mrf.mxu0
    %395 = vdwg.mxu0
    %v396 = vxor.u32 %v393, 2147483648
    %v397 = vmul.f32 %v396, 1.442695
    %v398 = vpow.pop %v397
    %v399 = vadd.f32 %v398, 1.0
    %v400 = vrcp.pop %v399
    %v401 = vmul.f32 1.0, %v400
    %v402 = vmul.f32 %v401, 2.0
    %v403 = vmul.f32 %v304, %v402
    %v404 = vld [vmem:[%s5 + $0x2] sm:$0x1]
    %v405 = vld [vmem:[%s5 + $0x3] sm:$0x1]
    %v406 = vld [vmem:[%s8] sm:$0xff]
    %v407 = vld [vmem:[%s8 + $0x8] sm:$0xff]
    %v408 = vld [vmem:[%s8 + $0x10] sm:$0xff]
    %v409 = vld [vmem:[%s8 + $0x18] sm:$0xff]
    %v410 = vlaneseq
    %v411 = vshrl.u32 %v410, 7
    %v412 = vsub.s32 0, %v411
    %v413 = vrot.slane %v404, %v412
    %v415 = vsel %vm57, %v403, 0
    %417 = vmatprep.subr.mxu0 0.0
    %418 = vmatpush1.msra.mxu0 0.0
    %419 = vmatprep.subr.mxu0 0.0
    %420 = vmatpush1.msra.mxu0 0.0
    %421 = vmatprep.subr.mxu0 0.0
    %422 = vmatpush1.msra.mxu0 0.0
    %423 = vmatprep.subr.mxu0 0.0
    %424 = vmatpush1.msra.mxu0 0.0
    %425 = vmatprep.subr.mxu0 0.0
    %426 = vmatpush1.msra.mxu0 0.0
    %427 = vmatprep.subr.mxu0 0.0
    %428 = vmatpush1.msra.mxu0 0.0
    %429 = vmatprep.subr.mxu0 0.0
    %430 = vmatpush1.msra.mxu0 0.0
    %431 = vmatprep.subr.mxu0 0.0
    %432 = vmatpush1.msra.mxu0 0.0
    %433 = vmatprep.subr.mxu0 0.0
    %434 = vmatpush1.msra.mxu0 0.0
    %435 = vmatprep.subr.mxu0 0.0
    %436 = vmatpush1.msra.mxu0 0.0
    %437 = vmatprep.subr.mxu0 0.0
    %438 = vmatpush1.msra.mxu0 0.0
    %439 = vmatprep.subr.mxu0 0.0
    %440 = vmatpush1.msra.mxu0 0.0
    %441 = vmatprep.subr.mxu0 0.0
    %442 = vmatpush1.msra.mxu0 %v409
    %443 = vmatprep.subr.mxu0 0.0
    %444 = vmatpush1.msra.mxu0 %v408
    %445 = vmatprep.subr.mxu0 0.0
    %446 = vmatpush1.msra.mxu0 %v407
    %447 = vmatprep.subr.mxu0 0.0
    %448 = vmatpush1.msra.mxu0 %v406
    %449 = vmatprep.subr.mxu0 0.0
    %450 = vmatpush2.msra.mxu0 0.0
    %451 = vmatprep.subr.mxu0 0.0
    %452 = vmatpush2.msra.mxu0 0.0
    %453 = vmatprep.subr.mxu0 0.0
    %454 = vmatpush2.msra.mxu0 0.0
    %455 = vmatprep.subr.mxu0 0.0
    %456 = vmatpush2.msra.mxu0 0.0
    %457 = vmatprep.subr.mxu0 0.0
    %458 = vmatpush2.msra.mxu0 0.0
    %459 = vmatprep.subr.mxu0 0.0
    %460 = vmatpush2.msra.mxu0 0.0
    %461 = vmatprep.subr.mxu0 0.0
    %462 = vmatpush2.msra.mxu0 0.0
    %463 = vmatprep.subr.mxu0 0.0
    %464 = vmatpush2.msra.mxu0 0.0
    %465 = vmatprep.subr.mxu0 0.0
    %466 = vmatpush2.msra.mxu0 0.0
    %467 = vmatprep.subr.mxu0 0.0
    %468 = vmatpush2.msra.mxu0 0.0
    %469 = vmatprep.subr.mxu0 0.0
    %470 = vmatpush2.msra.mxu0 0.0
    %471 = vmatprep.subr.mxu0 0.0
    %472 = vmatpush2.msra.mxu0 0.0
    %473 = vmatprep.subr.mxu0 0.0
    %474 = vmatpush2.msra.mxu0 0.0
    %475 = vmatprep.subr.mxu0 0.0
    %476 = vmatpush2.msra.mxu0 0.0
    %477 = vmatprep.subr.mxu0 0.0
    %478 = vmatpush2.msra.mxu0 0.0
    %479 = vmatprep.subr.mxu0 0.0
    %480 = vmatpush2.msra.mxu0 0.0
    %481 = vmatprep.mubr.f32.mxu0 0.0
    %482 = vmatmul.mubr.f32.gmra.mxu0 %v415
    %v483 = vpop.f32.mrf.mxu0
    %v484 = vadd.f32 %v413, %v483
    %v485 = vpop.f32.mrf.mxu0
    %486 = vdwg.mxu0
    %v487 = vmax.f32 %v484, 0.0
    %v488 = vld [vmem:[#allocation2 + $0x8] sm:$0xff]
    %v489 = vld [vmem:[%s9] sm:$0xff]
    %v490 = vld [vmem:[%s9 + $0x8] sm:$0xff]
    %v491 = vld [vmem:[%s9 + $0x10] sm:$0xff]
    %v492 = vld [vmem:[%s9 + $0x18] sm:$0xff]
    %v493 = vld [vmem:[%s9 + $0x20] sm:$0xff]
    %v494 = vld [vmem:[%s9 + $0x28] sm:$0xff]
    %v495 = vld [vmem:[%s9 + $0x30] sm:$0xff]
    %v496 = vld [vmem:[%s9 + $0x38] sm:$0xff]
    %v497 = vld [vmem:[%s9 + $0x40] sm:$0xff]
    %v498 = vld [vmem:[%s9 + $0x48] sm:$0xff]
    %v499 = vld [vmem:[%s9 + $0x50] sm:$0xff]
    %v500 = vld [vmem:[%s9 + $0x58] sm:$0xff]
    %v501 = vld [vmem:[%s9 + $0x60] sm:$0xff]
    %v502 = vld [vmem:[%s9 + $0x68] sm:$0xff]
    %v503 = vld [vmem:[%s9 + $0x70] sm:$0xff]
    %v504 = vld [vmem:[%s9 + $0x78] sm:$0xff]
    %v505 = vlaneseq
    %v506 = vshrl.u32 %v505, 7
    %v507 = vsub.s32 0, %v506
    %v508 = vrot.slane %v405, %v507
    %509 = vmatprep.subr.mxu0 0.0
    %510 = vmatpush1.msra.mxu0 %v504
    %511 = vmatprep.subr.mxu0 0.0
    %512 = vmatpush1.msra.mxu0 %v503
    %513 = vmatprep.subr.mxu0 0.0
    %514 = vmatpush1.msra.mxu0 %v502
    %515 = vmatprep.subr.mxu0 0.0
    %516 = vmatpush1.msra.mxu0 %v501
    %517 = vmatprep.subr.mxu0 0.0
    %518 = vmatpush1.msra.mxu0 %v500
    %519 = vmatprep.subr.mxu0 0.0
    %520 = vmatpush1.msra.mxu0 %v499
    %521 = vmatprep.subr.mxu0 0.0
    %522 = vmatpush1.msra.mxu0 %v498
    %523 = vmatprep.subr.mxu0 0.0
    %524 = vmatpush1.msra.mxu0 %v497
    %525 = vmatprep.subr.mxu0 0.0
    %526 = vmatpush1.msra.mxu0 %v496
    %527 = vmatprep.subr.mxu0 0.0
    %528 = vmatpush1.msra.mxu0 %v495
    %529 = vmatprep.subr.mxu0 0.0
    %530 = vmatpush1.msra.mxu0 %v494
    %531 = vmatprep.subr.mxu0 0.0
    %532 = vmatpush1.msra.mxu0 %v493
    %533 = vmatprep.subr.mxu0 0.0
    %534 = vmatpush1.msra.mxu0 %v492
    %535 = vmatprep.subr.mxu0 0.0
    %536 = vmatpush1.msra.mxu0 %v491
    %537 = vmatprep.subr.mxu0 0.0
    %538 = vmatpush1.msra.mxu0 %v490
    %539 = vmatprep.subr.mxu0 0.0
    %540 = vmatpush1.msra.mxu0 %v489
    %541 = vmatprep.subr.mxu0 0.0
    %542 = vmatpush2.msra.mxu0 0.0
    %543 = vmatprep.subr.mxu0 0.0
    %544 = vmatpush2.msra.mxu0 0.0
    %545 = vmatprep.subr.mxu0 0.0
    %546 = vmatpush2.msra.mxu0 0.0
    %547 = vmatprep.subr.mxu0 0.0
    %548 = vmatpush2.msra.mxu0 0.0
    %549 = vmatprep.subr.mxu0 0.0
    %550 = vmatpush2.msra.mxu0 0.0
    %551 = vmatprep.subr.mxu0 0.0
    %552 = vmatpush2.msra.mxu0 0.0
    %553 = vmatprep.subr.mxu0 0.0
    %554 = vmatpush2.msra.mxu0 0.0
    %555 = vmatprep.subr.mxu0 0.0
    %556 = vmatpush2.msra.mxu0 0.0
    %557 = vmatprep.subr.mxu0 0.0
    %558 = vmatpush2.msra.mxu0 0.0
    %559 = vmatprep.subr.mxu0 0.0
    %560 = vmatpush2.msra.mxu0 0.0
    %561 = vmatprep.subr.mxu0 0.0
    %562 = vmatpush2.msra.mxu0 0.0
    %563 = vmatprep.subr.mxu0 0.0
    %564 = vmatpush2.msra.mxu0 0.0
    %565 = vmatprep.subr.mxu0 0.0
    %566 = vmatpush2.msra.mxu0 0.0
    %567 = vmatprep.subr.mxu0 0.0
    %568 = vmatpush2.msra.mxu0 0.0
    %569 = vmatprep.subr.mxu0 0.0
    %570 = vmatpush2.msra.mxu0 0.0
    %571 = vmatprep.subr.mxu0 0.0
    %572 = vmatpush2.msra.mxu0 0.0
    %573 = vmatprep.mubr.f32.mxu0 0.0
    %574 = vmatmul.mubr.f32.gmra.mxu0 %v488
    %v575 = vpop.f32.mrf.mxu0
    %v576 = vadd.f32 %v508, %v575
    %v577 = vpop.f32.mrf.mxu0
    %578 = vdwg.mxu0
    %v579 = vxor.u32 %v576, 2147483648
    %v580 = vmul.f32 %v579, 1.442695
    %v581 = vpow.pop %v580
    %v582 = vadd.f32 %v581, 1.0
    %v583 = vrcp.pop %v582
    %v584 = vmul.f32 1.0, %v583
    %v585 = vmul.f32 %v584, 2.0
    %v586 = vmul.f32 %v487, %v585
    %v587 = vld [vmem:[%s5 + $0x4] sm:$0x1]
    %v588 = vld [vmem:[%s10] sm:$0xff]
    %v589 = vld [vmem:[%s10 + $0x8] sm:$0xff]
    %v590 = vld [vmem:[%s10 + $0x10] sm:$0xff]
    %v591 = vld [vmem:[%s10 + $0x18] sm:$0xff]
    %v592 = vlaneseq
    %v593 = vshrl.u32 %v592, 7
    %v594 = vsub.s32 0, %v593
    %v595 = vrot.slane %v587, %v594
    %v597 = vsel %vm57, %v586, 0
    %599 = vmatprep.subr.mxu0 0.0
    %600 = vmatpush1.msra.mxu0 0.0
    %601 = vmatprep.subr.mxu0 0.0
    %602 = vmatpush1.msra.mxu0 0.0
    %603 = vmatprep.subr.mxu0 0.0
    %604 = vmatpush1.msra.mxu0 0.0
    %605 = vmatprep.subr.mxu0 0.0
    %606 = vmatpush1.msra.mxu0 0.0
    %607 = vmatprep.subr.mxu0 0.0
    %608 = vmatpush1.msra.mxu0 0.0
    %609 = vmatprep.subr.mxu0 0.0
    %610 = vmatpush1.msra.mxu0 0.0
    %611 = vmatprep.subr.mxu0 0.0
    %612 = vmatpush1.msra.mxu0 0.0
    %613 = vmatprep.subr.mxu0 0.0
    %614 = vmatpush1.msra.mxu0 0.0
    %615 = vmatprep.subr.mxu0 0.0
    %616 = vmatpush1.msra.mxu0 0.0
    %617 = vmatprep.subr.mxu0 0.0
    %618 = vmatpush1.msra.mxu0 0.0
    %619 = vmatprep.subr.mxu0 0.0
    %620 = vmatpush1.msra.mxu0 0.0
    %621 = vmatprep.subr.mxu0 0.0
    %622 = vmatpush1.msra.mxu0 0.0
    %623 = vmatprep.subr.mxu0 0.0
    %624 = vmatpush1.msra.mxu0 %v591
    %625 = vmatprep.subr.mxu0 0.0
    %626 = vmatpush1.msra.mxu0 %v590
    %627 = vmatprep.subr.mxu0 0.0
    %628 = vmatpush1.msra.mxu0 %v589
    %629 = vmatprep.subr.mxu0 0.0
    %630 = vmatpush1.msra.mxu0 %v588
    %631 = vmatprep.subr.mxu0 0.0
    %632 = vmatpush2.msra.mxu0 0.0
    %633 = vmatprep.subr.mxu0 0.0
    %634 = vmatpush2.msra.mxu0 0.0
    %635 = vmatprep.subr.mxu0 0.0
    %636 = vmatpush2.msra.mxu0 0.0
    %637 = vmatprep.subr.mxu0 0.0
    %638 = vmatpush2.msra.mxu0 0.0
    %639 = vmatprep.subr.mxu0 0.0
    %640 = vmatpush2.msra.mxu0 0.0
    %641 = vmatprep.subr.mxu0 0.0
    %642 = vmatpush2.msra.mxu0 0.0
    %643 = vmatprep.subr.mxu0 0.0
    %644 = vmatpush2.msra.mxu0 0.0
    %645 = vmatprep.subr.mxu0 0.0
    %646 = vmatpush2.msra.mxu0 0.0
    %647 = vmatprep.subr.mxu0 0.0
    %648 = vmatpush2.msra.mxu0 0.0
    %649 = vmatprep.subr.mxu0 0.0
    %650 = vmatpush2.msra.mxu0 0.0
    %651 = vmatprep.subr.mxu0 0.0
    %652 = vmatpush2.msra.mxu0 0.0
    %653 = vmatprep.subr.mxu0 0.0
    %654 = vmatpush2.msra.mxu0 0.0
    %655 = vmatprep.subr.mxu0 0.0
    %656 = vmatpush2.msra.mxu0 0.0
    %657 = vmatprep.subr.mxu0 0.0
    %658 = vmatpush2.msra.mxu0 0.0
    %659 = vmatprep.subr.mxu0 0.0
    %660 = vmatpush2.msra.mxu0 0.0
    %661 = vmatprep.subr.mxu0 0.0
    %662 = vmatpush2.msra.mxu0 0.0
    %663 = vmatprep.mubr.f32.mxu0 0.0
    %664 = vmatmul.mubr.f32.gmra.mxu0 %v597
    %v665 = vpop.f32.mrf.mxu0
    %v666 = vadd.f32 %v595, %v665
    %v667 = vpop.f32.mrf.mxu0
    %668 = vdwg.mxu0
    %669 = vst [vmem:[#allocation3] sm:$0xff] %v666
    // Predicated region
    $region46: #{tpu_custom_call.1} parent=1 // pred_check
      _
    $region47: #{tpu_custom_call.1} parent=1 // pred_check_branch
      %671 = sbr.rel (0) target = $region49
    $region48: #{tpu_custom_call.1} parent=1 // pred_region
      %s673 = ssub.s32 128, 128
      %674 = vsyncadd [#allocation4], %s673
      %s676 = sshll.u32 [#allocation3], 4
      %s677 = int_to_ptr.vmem [resolvable:$true] %s676
      %679 = dma.vmem_to_hbm [thread:$0]  %s677, 128, %s11, [#allocation4]
    $region49: #{tpu_custom_call.1} parent=1 // pred_fallthru
      _
    // Predicated region
    $region50: #{tpu_custom_call.1} parent=1 // pred_check
      _
    $region51: #{tpu_custom_call.1} parent=1 // pred_check_branch
      %681 = sbr.rel (0) target = $region53
    $region52: #{tpu_custom_call.1} parent=1 // pred_region
      %682 = dma.done [#allocation4], 128
    $region53: #{tpu_custom_call.1} parent=1 // pred_fallthru
      _
    %683 = vsyncpa [#allocation4], 1

</llo_original>
